<compile_context>
chip_gen: v7x
topology: tpu7x:2x2x1
jax: 0.10.0
libtpu: 0.0.40
codegen_flags: <defaults>
</compile_context>

<pallas_src>
import jax
import jax.numpy as jnp
from jax import lax
from jax.experimental import pallas as pl
from jax.experimental.pallas import tpu as pltpu


# ----------------------------- fused Pallas kernel ----------------------------

def make_text_model_kernel(T, B, num_layers, compute_dtype):
    """Fused kernel: embedding -> stacked (wavefront-interleaved) LSTM -> FC -> sigmoid."""

    def kernel(ids_ref, table_ref, *rest):
        # rest = [wih_t, whh_t, bias] * num_layers + [fc_row, fc_b] + [out_ref]
        out_ref = rest[-1]
        fcw_ref = rest[-3]            # [1, H]
        fcb_ref = rest[-2]            # [1, 1]
        layer_refs = rest[:-3]

        TB = ids_ref.shape[0]         # T * B (time-major rows: r = t*B + b)
        V, _ = table_ref.shape
        H = layer_refs[1].shape[0]    # whh_t is [H, 4H]

        # ---- Embedding: in-kernel one-hot (iota compare) @ table on the MXU.
        # Exact for in-range ids; out-of-range ids give a zero row (PyTorch would raise).
        ids = ids_ref[...]                                               # [TB, 1] int32
        onehot = (ids == lax.broadcasted_iota(jnp.int32, (TB, V), 1)
                  ).astype(compute_dtype)                                # [TB, V]
        x_seq = jnp.dot(onehot, table_ref[...],
                        preferred_element_type=jnp.float32)              # [TB, E] f32

        wih = [layer_refs[3 * l][...] for l in range(num_layers)]        # [In, 4H]
        whh = [layer_refs[3 * l + 1][...] for l in range(num_layers)]    # [H, 4H]
        bias = [layer_refs[3 * l + 2][...] for l in range(num_layers)]   # [1, 4H] f32

        # Layer-0 input projection for ALL timesteps in one MXU matmul (bias folded once).
        gates_x0 = jnp.dot(x_seq.astype(compute_dtype), wih[0],
                           preferred_element_type=jnp.float32) + bias[0]  # [TB, 4H]

        # ---- Wavefront schedule over (layer, time): layer l runs timestep t at step
        # s = t + l, so the dependent-cell-update chain is ~T + L - 1 instead of L*T.
        h_st = [jnp.zeros((B, H), jnp.float32) for _ in range(num_layers)]
        c_st = [jnp.zeros((B, H), jnp.float32) for _ in range(num_layers)]
        pending = [None] * num_layers   # per-layer input projection for its next timestep

        for s in range(T + num_layers - 1):     # small & static: fully unrolled
            # reversed(layer) so layer l+1 consumes pending[l+1] from the previous
            # wavefront step before layer l overwrites it with the next one.
            for l in reversed(range(num_layers)):
                t = s - l
                if t < 0 or t >= T:
                    continue
                gx = gates_x0[t * B:(t + 1) * B, :] if l == 0 else pending[l]
                g = gx + jnp.dot(h_st[l].astype(compute_dtype), whh[l],
                                 preferred_element_type=jnp.float32)      # [B, 4H]
                # Gate columns were reordered host-side to (i, f, o, g):
                # sigmoid over the first 3H columns only, tanh over the last H only.
                sg = jax.nn.sigmoid(g[:, :3 * H])
                g_g = jnp.tanh(g[:, 3 * H:])
                i_g = sg[:, 0 * H:1 * H]
                f_g = sg[:, 1 * H:2 * H]
                o_g = sg[:, 2 * H:3 * H]
                c_new = f_g * c_st[l] + i_g * g_g
                h_new = o_g * jnp.tanh(c_new)
                c_st[l] = c_new
                h_st[l] = h_new
                # Feed the next layer immediately: its per-timestep input projection.
                # (inter-layer LSTM dropout is identity at inference)
                if l + 1 < num_layers:
                    pending[l + 1] = jnp.dot(h_new.astype(compute_dtype), wih[l + 1],
                                             preferred_element_type=jnp.float32) + bias[l + 1]

        # ---- out[:, -1, :] -> Dropout(eval: identity) -> Linear(H, 1) -> Sigmoid
        # N=1 FC as VPU multiply + lane reduction (no 1-lane-wide MXU matmul).
        h_last = h_st[num_layers - 1]                                     # [B, H] f32
        logits = jnp.sum(h_last * fcw_ref[...], axis=-1, keepdims=True) + fcb_ref[...]
        out_ref[...] = jax.nn.sigmoid(logits)

    return kernel


# ------------------------------ Python wrapper --------------------------------

def _vmem_spec():
    return pl.BlockSpec(memory_space=pltpu.MemorySpace.VMEM)


def _permute_gate_rows(w):
    """PyTorch packs LSTM gates (i, f, g, o) along dim 0; reorder to (i, f, o, g)."""
    H = w.shape[0] // 4
    return jnp.concatenate([w[:H], w[H:2 * H], w[3 * H:], w[2 * H:3 * H]], axis=0)


def init_params(key, vocab, emb, hidden, layers):
    """Deterministic parameter init mimicking PyTorch defaults."""
    keys = jax.random.split(key, 3 + 4 * layers)
    k = 1.0 / jnp.sqrt(hidden).astype(jnp.float32)
    params = {"embedding": jax.random.normal(keys[0], (vocab, emb), jnp.float32)}
    lstm = []
    idx = 1
    for l in range(layers):
        in_dim = emb if l == 0 else hidden
        wih = jax.random.uniform(keys[idx], (4 * hidden, in_dim), jnp.float32, -k, k); idx += 1
        whh = jax.random.uniform(keys[idx], (4 * hidden, hidden), jnp.float32, -k, k); idx += 1
        bih = jax.random.uniform(keys[idx], (4 * hidden,), jnp.float32, -k, k); idx += 1
        bhh = jax.random.uniform(keys[idx], (4 * hidden,), jnp.float32, -k, k); idx += 1
        lstm.append((wih, whh, bih, bhh))
    params["lstm"] = lstm
    params["fc_w"] = jax.random.uniform(keys[-2], (1, hidden), jnp.float32, -k, k)
    params["fc_b"] = jax.random.uniform(keys[-1], (1,), jnp.float32, -k, k)
    return params


def text_model_forward(ids, params, compute_dtype=jnp.float32):
    """ids: [B, T] integer tokens -> [B, 1] sigmoid outputs (single fused kernel).

    compute_dtype: dtype of MXU matmul operands (use jnp.bfloat16 on v6e/v7x for
    half the weight DMA bytes and 2x MXU rate); accumulation & cell math stay f32.
    """
    B, T = ids.shape
    V, E = params["embedding"].shape
    H = params["lstm"][0][1].shape[1]
    L = len(params["lstm"])

    # Time-major flatten: row r = t*B + b.
    ids_tb = ids.T.astype(jnp.int32).reshape(T * B, 1)

    args = [ids_tb, params["embedding"].astype(compute_dtype)]
    for (wih, whh, bih, bhh) in params["lstm"]:
        args += [
            _permute_gate_rows(wih).T.astype(compute_dtype),            # [In, 4H], cols (i,f,o,g)
            _permute_gate_rows(whh).T.astype(compute_dtype),            # [H, 4H],  cols (i,f,o,g)
            _permute_gate_rows(bih + bhh).reshape(1, 4 * H).astype(jnp.float32),
        ]
    args += [params["fc_w"].reshape(1, H).astype(jnp.float32),          # [1, H] (VPU row)
             params["fc_b"].reshape(1, 1).astype(jnp.float32)]          # [1, 1]

    # Scoped-VMEM budget sized from the actual argument footprint (with headroom),
    # clamped so toy sizes stay at/below the per-chip defaults.
    arg_bytes = sum(int(a.size) * a.dtype.itemsize for a in args)
    vmem_limit = int(min(48 << 20, max(16 << 20, 4 * arg_bytes + (2 << 20))))

    out = pl.pallas_call(
        make_text_model_kernel(T, B, L, compute_dtype),
        out_shape=jax.ShapeDtypeStruct((B, 1), jnp.float32),
        in_specs=[_vmem_spec()] * len(args),
        out_specs=_vmem_spec(),
        compiler_params=pltpu.CompilerParams(vmem_limit_bytes=vmem_limit),
    )(*args)
    return out


# ------------------------------ pure-JAX reference ----------------------------

def reference_forward(ids, params):
    B, T = ids.shape
    H = params["lstm"][0][1].shape[1]
    out = params["embedding"][ids]                                     # [B, T, E]
    for (wih, whh, bih, bhh) in params["lstm"]:
        h = jnp.zeros((B, H), jnp.float32)
        c = jnp.zeros((B, H), jnp.float32)
        hs = []
        for t in range(T):
            g = out[:, t, :] @ wih.T + h @ whh.T + bih + bhh
            i = jax.nn.sigmoid(g[:, :H])
            f = jax.nn.sigmoid(g[:, H:2 * H])
            gg = jnp.tanh(g[:, 2 * H:3 * H])
            o = jax.nn.sigmoid(g[:, 3 * H:])
            c = f * c + i * gg
            h = o * jnp.tanh(c)
            hs.append(h)
        out = jnp.stack(hs, axis=1)                                    # [B, T, H]
    last = out[:, -1, :]
    return jax.nn.sigmoid(last @ params["fc_w"].T + params["fc_b"])


# ----------------------------------- main -------------------------------------

if __name__ == "__main__":
    VOCAB, EMB, HIDDEN, LAYERS, LSTM_DROPOUT = 64, 32, 32, 2, 0.5
    B, T = 8, 8

    key = jax.random.PRNGKey(0)
    kp, kx = jax.random.split(key)
    params = init_params(kp, VOCAB, EMB, HIDDEN, LAYERS)
    ids = jax.random.randint(kx, (B, T), 0, VOCAB, dtype=jnp.int32)

    ref = reference_forward(ids, params)

    # f32 matmul operands: exact match against the pure-JAX reference.
    out_f32 = jax.block_until_ready(text_model_forward(ids, params, jnp.float32))
    assert out_f32.shape == (B, 1), out_f32.shape
    assert bool(jnp.all(jnp.isfinite(out_f32)))
    assert bool(jnp.allclose(out_f32, ref, atol=1e-5, rtol=1e-5)), (out_f32, ref)

    # bf16 matmul operands (v6e/v7x fast path): loose tolerance vs. the f32 reference.
    out_bf16 = jax.block_until_ready(text_model_forward(ids, params, jnp.bfloat16))
    assert out_bf16.shape == (B, 1), out_bf16.shape
    assert bool(jnp.all(jnp.isfinite(out_bf16)))
    assert bool(jnp.allclose(out_bf16, ref, atol=5e-2)), (out_bf16, ref)

    print("KERNEL_OK")
</pallas_src>

<mosaic_0001>
module attributes {stable_mosaic.version = 11 : i64} {
  func.func @kernel(%arg0: memref<64x1xi32, #tpu.memory_space<vmem>>, %arg1: memref<64x32xf32, #tpu.memory_space<vmem>>, %arg2: memref<32x128xf32, #tpu.memory_space<vmem>>, %arg3: memref<32x128xf32, #tpu.memory_space<vmem>>, %arg4: memref<1x128xf32, #tpu.memory_space<vmem>>, %arg5: memref<32x128xf32, #tpu.memory_space<vmem>>, %arg6: memref<32x128xf32, #tpu.memory_space<vmem>>, %arg7: memref<1x128xf32, #tpu.memory_space<vmem>>, %arg8: memref<1x32xf32, #tpu.memory_space<vmem>>, %arg9: memref<1x1xf32, #tpu.memory_space<vmem>>, %arg10: memref<8x1xf32, #tpu.memory_space<vmem>>) attributes {dimension_semantics = [], scalar_prefetch = 0 : i64, scratch_operands = 0 : i64, tpu.core_type = #tpu.core_type<tc>} {
    %c0 = arith.constant 0 : index
    %c0_0 = arith.constant 0 : index
    %0 = vector.load %arg0[%c0, %c0_0] : memref<64x1xi32, #tpu.memory_space<vmem>>, vector<64x1xi32>
    %1 = tpu.iota {dimensions = array<i32: 1>} : vector<64x64xi32>
    %2 = vector.broadcast %0 : vector<64x1xi32> to vector<64x64xi32>
    %3 = arith.cmpi eq, %2, %1 : vector<64x64xi32>
    %4 = arith.extui %3 : vector<64x64xi1> to vector<64x64xi32>
    %5 = arith.sitofp %4 : vector<64x64xi32> to vector<64x64xf32>
    %c0_1 = arith.constant 0 : index
    %c0_2 = arith.constant 0 : index
    %6 = vector.load %arg1[%c0_1, %c0_2] : memref<64x32xf32, #tpu.memory_space<vmem>>, vector<64x32xf32>
    %cst = arith.constant dense<0.000000e+00> : vector<64x32xf32>
    %7 = tpu.matmul %5, %6, %cst {dimension_numbers = #tpu.dot_dimension_numbers<[1], [0], [0], [1], [0, 0, 1, 1], [], []>} : vector<64x64xf32>, vector<64x32xf32>, vector<64x32xf32> -> vector<64x32xf32>
    %c0_3 = arith.constant 0 : index
    %c0_4 = arith.constant 0 : index
    %8 = vector.load %arg2[%c0_3, %c0_4] : memref<32x128xf32, #tpu.memory_space<vmem>>, vector<32x128xf32>
    %c0_5 = arith.constant 0 : index
    %c0_6 = arith.constant 0 : index
    %9 = vector.load %arg5[%c0_5, %c0_6] : memref<32x128xf32, #tpu.memory_space<vmem>>, vector<32x128xf32>
    %c0_7 = arith.constant 0 : index
    %c0_8 = arith.constant 0 : index
    %10 = vector.load %arg3[%c0_7, %c0_8] : memref<32x128xf32, #tpu.memory_space<vmem>>, vector<32x128xf32>
    %c0_9 = arith.constant 0 : index
    %c0_10 = arith.constant 0 : index
    %11 = vector.load %arg6[%c0_9, %c0_10] : memref<32x128xf32, #tpu.memory_space<vmem>>, vector<32x128xf32>
    %c0_11 = arith.constant 0 : index
    %c0_12 = arith.constant 0 : index
    %12 = vector.load %arg4[%c0_11, %c0_12] : memref<1x128xf32, #tpu.memory_space<vmem>>, vector<1x128xf32>
    %c0_13 = arith.constant 0 : index
    %c0_14 = arith.constant 0 : index
    %13 = vector.load %arg7[%c0_13, %c0_14] : memref<1x128xf32, #tpu.memory_space<vmem>>, vector<1x128xf32>
    %cst_15 = arith.constant dense<0.000000e+00> : vector<64x128xf32>
    %14 = tpu.matmul %7, %8, %cst_15 {dimension_numbers = #tpu.dot_dimension_numbers<[1], [0], [0], [1], [0, 0, 1, 1], [], []>} : vector<64x32xf32>, vector<32x128xf32>, vector<64x128xf32> -> vector<64x128xf32>
    %15 = vector.broadcast %12 : vector<1x128xf32> to vector<64x128xf32>
    %16 = arith.addf %14, %15 : vector<64x128xf32>
    %cst_16 = arith.constant 0.000000e+00 : f32
    %17 = vector.broadcast %cst_16 : f32 to vector<8x32xf32>
    %cst_17 = arith.constant 0.000000e+00 : f32
    %18 = vector.broadcast %cst_17 : f32 to vector<8x32xf32>
    %cst_18 = arith.constant 0.000000e+00 : f32
    %19 = vector.broadcast %cst_18 : f32 to vector<8x32xf32>
    %cst_19 = arith.constant 0.000000e+00 : f32
    %20 = vector.broadcast %cst_19 : f32 to vector<8x32xf32>
    %21 = vector.extract_strided_slice %16 {offsets = [0, 0], sizes = [8, 128], strides = [1, 1]} : vector<64x128xf32> to vector<8x128xf32>
    %cst_20 = arith.constant dense<0.000000e+00> : vector<8x128xf32>
    %22 = tpu.matmul %17, %10, %cst_20 {dimension_numbers = #tpu.dot_dimension_numbers<[1], [0], [0], [1], [0, 0, 1, 1], [], []>} : vector<8x32xf32>, vector<32x128xf32>, vector<8x128xf32> -> vector<8x128xf32>
    %23 = arith.addf %21, %22 : vector<8x128xf32>
    %24 = vector.extract_strided_slice %23 {offsets = [0, 0], sizes = [8, 96], strides = [1, 1]} : vector<8x128xf32> to vector<8x96xf32>
    %25 = arith.negf %24 : vector<8x96xf32>
    %26 = math.exp %25 : vector<8x96xf32>
    %cst_21 = arith.constant 1.000000e+00 : f32
    %27 = vector.broadcast %cst_21 : f32 to vector<8x96xf32>
    %28 = arith.addf %27, %26 : vector<8x96xf32>
    %29 = arith.divf %27, %28 : vector<8x96xf32>
    %30 = vector.extract_strided_slice %23 {offsets = [0, 96], sizes = [8, 32], strides = [1, 1]} : vector<8x128xf32> to vector<8x32xf32>
    %31 = math.tanh %30 : vector<8x32xf32>
    %32 = vector.extract_strided_slice %29 {offsets = [0, 0], sizes = [8, 32], strides = [1, 1]} : vector<8x96xf32> to vector<8x32xf32>
    %33 = vector.extract_strided_slice %29 {offsets = [0, 32], sizes = [8, 32], strides = [1, 1]} : vector<8x96xf32> to vector<8x32xf32>
    %34 = vector.extract_strided_slice %29 {offsets = [0, 64], sizes = [8, 32], strides = [1, 1]} : vector<8x96xf32> to vector<8x32xf32>
    %35 = arith.mulf %33, %19 : vector<8x32xf32>
    %36 = arith.mulf %32, %31 : vector<8x32xf32>
    %37 = arith.addf %35, %36 : vector<8x32xf32>
    %38 = math.tanh %37 : vector<8x32xf32>
    %39 = arith.mulf %34, %38 : vector<8x32xf32>
    %cst_22 = arith.constant dense<0.000000e+00> : vector<8x128xf32>
    %40 = tpu.matmul %39, %9, %cst_22 {dimension_numbers = #tpu.dot_dimension_numbers<[1], [0], [0], [1], [0, 0, 1, 1], [], []>} : vector<8x32xf32>, vector<32x128xf32>, vector<8x128xf32> -> vector<8x128xf32>
    %41 = vector.broadcast %13 : vector<1x128xf32> to vector<8x128xf32>
    %42 = arith.addf %40, %41 : vector<8x128xf32>
    %cst_23 = arith.constant dense<0.000000e+00> : vector<8x128xf32>
    %43 = tpu.matmul %18, %11, %cst_23 {dimension_numbers = #tpu.dot_dimension_numbers<[1], [0], [0], [1], [0, 0, 1, 1], [], []>} : vector<8x32xf32>, vector<32x128xf32>, vector<8x128xf32> -> vector<8x128xf32>
    %44 = arith.addf %42, %43 : vector<8x128xf32>
    %45 = vector.extract_strided_slice %44 {offsets = [0, 0], sizes = [8, 96], strides = [1, 1]} : vector<8x128xf32> to vector<8x96xf32>
    %46 = arith.negf %45 : vector<8x96xf32>
    %47 = math.exp %46 : vector<8x96xf32>
    %cst_24 = arith.constant 1.000000e+00 : f32
    %48 = vector.broadcast %cst_24 : f32 to vector<8x96xf32>
    %49 = arith.addf %48, %47 : vector<8x96xf32>
    %50 = arith.divf %48, %49 : vector<8x96xf32>
    %51 = vector.extract_strided_slice %44 {offsets = [0, 96], sizes = [8, 32], strides = [1, 1]} : vector<8x128xf32> to vector<8x32xf32>
    %52 = math.tanh %51 : vector<8x32xf32>
    %53 = vector.extract_strided_slice %50 {offsets = [0, 0], sizes = [8, 32], strides = [1, 1]} : vector<8x96xf32> to vector<8x32xf32>
    %54 = vector.extract_strided_slice %50 {offsets = [0, 32], sizes = [8, 32], strides = [1, 1]} : vector<8x96xf32> to vector<8x32xf32>
    %55 = vector.extract_strided_slice %50 {offsets = [0, 64], sizes = [8, 32], strides = [1, 1]} : vector<8x96xf32> to vector<8x32xf32>
    %56 = arith.mulf %54, %20 : vector<8x32xf32>
    %57 = arith.mulf %53, %52 : vector<8x32xf32>
    %58 = arith.addf %56, %57 : vector<8x32xf32>
    %59 = math.tanh %58 : vector<8x32xf32>
    %60 = arith.mulf %55, %59 : vector<8x32xf32>
    %61 = vector.extract_strided_slice %16 {offsets = [8, 0], sizes = [8, 128], strides = [1, 1]} : vector<64x128xf32> to vector<8x128xf32>
    %cst_25 = arith.constant dense<0.000000e+00> : vector<8x128xf32>
    %62 = tpu.matmul %39, %10, %cst_25 {dimension_numbers = #tpu.dot_dimension_numbers<[1], [0], [0], [1], [0, 0, 1, 1], [], []>} : vector<8x32xf32>, vector<32x128xf32>, vector<8x128xf32> -> vector<8x128xf32>
    %63 = arith.addf %61, %62 : vector<8x128xf32>
    %64 = vector.extract_strided_slice %63 {offsets = [0, 0], sizes = [8, 96], strides = [1, 1]} : vector<8x128xf32> to vector<8x96xf32>
    %65 = arith.negf %64 : vector<8x96xf32>
    %66 = math.exp %65 : vector<8x96xf32>
    %cst_26 = arith.constant 1.000000e+00 : f32
    %67 = vector.broadcast %cst_26 : f32 to vector<8x96xf32>
    %68 = arith.addf %67, %66 : vector<8x96xf32>
    %69 = arith.divf %67, %68 : vector<8x96xf32>
    %70 = vector.extract_strided_slice %63 {offsets = [0, 96], sizes = [8, 32], strides = [1, 1]} : vector<8x128xf32> to vector<8x32xf32>
    %71 = math.tanh %70 : vector<8x32xf32>
    %72 = vector.extract_strided_slice %69 {offsets = [0, 0], sizes = [8, 32], strides = [1, 1]} : vector<8x96xf32> to vector<8x32xf32>
    %73 = vector.extract_strided_slice %69 {offsets = [0, 32], sizes = [8, 32], strides = [1, 1]} : vector<8x96xf32> to vector<8x32xf32>
    %74 = vector.extract_strided_slice %69 {offsets = [0, 64], sizes = [8, 32], strides = [1, 1]} : vector<8x96xf32> to vector<8x32xf32>
    %75 = arith.mulf %73, %37 : vector<8x32xf32>
    %76 = arith.mulf %72, %71 : vector<8x32xf32>
    %77 = arith.addf %75, %76 : vector<8x32xf32>
    %78 = math.tanh %77 : vector<8x32xf32>
    %79 = arith.mulf %74, %78 : vector<8x32xf32>
    %cst_27 = arith.constant dense<0.000000e+00> : vector<8x128xf32>
    %80 = tpu.matmul %79, %9, %cst_27 {dimension_numbers = #tpu.dot_dimension_numbers<[1], [0], [0], [1], [0, 0, 1, 1], [], []>} : vector<8x32xf32>, vector<32x128xf32>, vector<8x128xf32> -> vector<8x128xf32>
    %81 = vector.broadcast %13 : vector<1x128xf32> to vector<8x128xf32>
    %82 = arith.addf %80, %81 : vector<8x128xf32>
    %cst_28 = arith.constant dense<0.000000e+00> : vector<8x128xf32>
    %83 = tpu.matmul %60, %11, %cst_28 {dimension_numbers = #tpu.dot_dimension_numbers<[1], [0], [0], [1], [0, 0, 1, 1], [], []>} : vector<8x32xf32>, vector<32x128xf32>, vector<8x128xf32> -> vector<8x128xf32>
    %84 = arith.addf %82, %83 : vector<8x128xf32>
    %85 = vector.extract_strided_slice %84 {offsets = [0, 0], sizes = [8, 96], strides = [1, 1]} : vector<8x128xf32> to vector<8x96xf32>
    %86 = arith.negf %85 : vector<8x96xf32>
    %87 = math.exp %86 : vector<8x96xf32>
    %cst_29 = arith.constant 1.000000e+00 : f32
    %88 = vector.broadcast %cst_29 : f32 to vector<8x96xf32>
    %89 = arith.addf %88, %87 : vector<8x96xf32>
    %90 = arith.divf %88, %89 : vector<8x96xf32>
    %91 = vector.extract_strided_slice %84 {offsets = [0, 96], sizes = [8, 32], strides = [1, 1]} : vector<8x128xf32> to vector<8x32xf32>
    %92 = math.tanh %91 : vector<8x32xf32>
    %93 = vector.extract_strided_slice %90 {offsets = [0, 0], sizes = [8, 32], strides = [1, 1]} : vector<8x96xf32> to vector<8x32xf32>
    %94 = vector.extract_strided_slice %90 {offsets = [0, 32], sizes = [8, 32], strides = [1, 1]} : vector<8x96xf32> to vector<8x32xf32>
    %95 = vector.extract_strided_slice %90 {offsets = [0, 64], sizes = [8, 32], strides = [1, 1]} : vector<8x96xf32> to vector<8x32xf32>
    %96 = arith.mulf %94, %58 : vector<8x32xf32>
    %97 = arith.mulf %93, %92 : vector<8x32xf32>
    %98 = arith.addf %96, %97 : vector<8x32xf32>
    %99 = math.tanh %98 : vector<8x32xf32>
    %100 = arith.mulf %95, %99 : vector<8x32xf32>
    %101 = vector.extract_strided_slice %16 {offsets = [16, 0], sizes = [8, 128], strides = [1, 1]} : vector<64x128xf32> to vector<8x128xf32>
    %cst_30 = arith.constant dense<0.000000e+00> : vector<8x128xf32>
    %102 = tpu.matmul %79, %10, %cst_30 {dimension_numbers = #tpu.dot_dimension_numbers<[1], [0], [0], [1], [0, 0, 1, 1], [], []>} : vector<8x32xf32>, vector<32x128xf32>, vector<8x128xf32> -> vector<8x128xf32>
    %103 = arith.addf %101, %102 : vector<8x128xf32>
    %104 = vector.extract_strided_slice %103 {offsets = [0, 0], sizes = [8, 96], strides = [1, 1]} : vector<8x128xf32> to vector<8x96xf32>
    %105 = arith.negf %104 : vector<8x96xf32>
    %106 = math.exp %105 : vector<8x96xf32>
    %cst_31 = arith.constant 1.000000e+00 : f32
    %107 = vector.broadcast %cst_31 : f32 to vector<8x96xf32>
    %108 = arith.addf %107, %106 : vector<8x96xf32>
    %109 = arith.divf %107, %108 : vector<8x96xf32>
    %110 = vector.extract_strided_slice %103 {offsets = [0, 96], sizes = [8, 32], strides = [1, 1]} : vector<8x128xf32> to vector<8x32xf32>
    %111 = math.tanh %110 : vector<8x32xf32>
    %112 = vector.extract_strided_slice %109 {offsets = [0, 0], sizes = [8, 32], strides = [1, 1]} : vector<8x96xf32> to vector<8x32xf32>
    %113 = vector.extract_strided_slice %109 {offsets = [0, 32], sizes = [8, 32], strides = [1, 1]} : vector<8x96xf32> to vector<8x32xf32>
    %114 = vector.extract_strided_slice %109 {offsets = [0, 64], sizes = [8, 32], strides = [1, 1]} : vector<8x96xf32> to vector<8x32xf32>
    %115 = arith.mulf %113, %77 : vector<8x32xf32>
    %116 = arith.mulf %112, %111 : vector<8x32xf32>
    %117 = arith.addf %115, %116 : vector<8x32xf32>
    %118 = math.tanh %117 : vector<8x32xf32>
    %119 = arith.mulf %114, %118 : vector<8x32xf32>
    %cst_32 = arith.constant dense<0.000000e+00> : vector<8x128xf32>
    %120 = tpu.matmul %119, %9, %cst_32 {dimension_numbers = #tpu.dot_dimension_numbers<[1], [0], [0], [1], [0, 0, 1, 1], [], []>} : vector<8x32xf32>, vector<32x128xf32>, vector<8x128xf32> -> vector<8x128xf32>
    %121 = vector.broadcast %13 : vector<1x128xf32> to vector<8x128xf32>
    %122 = arith.addf %120, %121 : vector<8x128xf32>
    %cst_33 = arith.constant dense<0.000000e+00> : vector<8x128xf32>
    %123 = tpu.matmul %100, %11, %cst_33 {dimension_numbers = #tpu.dot_dimension_numbers<[1], [0], [0], [1], [0, 0, 1, 1], [], []>} : vector<8x32xf32>, vector<32x128xf32>, vector<8x128xf32> -> vector<8x128xf32>
    %124 = arith.addf %122, %123 : vector<8x128xf32>
    %125 = vector.extract_strided_slice %124 {offsets = [0, 0], sizes = [8, 96], strides = [1, 1]} : vector<8x128xf32> to vector<8x96xf32>
    %126 = arith.negf %125 : vector<8x96xf32>
    %127 = math.exp %126 : vector<8x96xf32>
    %cst_34 = arith.constant 1.000000e+00 : f32
    %128 = vector.broadcast %cst_34 : f32 to vector<8x96xf32>
    %129 = arith.addf %128, %127 : vector<8x96xf32>
    %130 = arith.divf %128, %129 : vector<8x96xf32>
    %131 = vector.extract_strided_slice %124 {offsets = [0, 96], sizes = [8, 32], strides = [1, 1]} : vector<8x128xf32> to vector<8x32xf32>
    %132 = math.tanh %131 : vector<8x32xf32>
    %133 = vector.extract_strided_slice %130 {offsets = [0, 0], sizes = [8, 32], strides = [1, 1]} : vector<8x96xf32> to vector<8x32xf32>
    %134 = vector.extract_strided_slice %130 {offsets = [0, 32], sizes = [8, 32], strides = [1, 1]} : vector<8x96xf32> to vector<8x32xf32>
    %135 = vector.extract_strided_slice %130 {offsets = [0, 64], sizes = [8, 32], strides = [1, 1]} : vector<8x96xf32> to vector<8x32xf32>
    %136 = arith.mulf %134, %98 : vector<8x32xf32>
    %137 = arith.mulf %133, %132 : vector<8x32xf32>
    %138 = arith.addf %136, %137 : vector<8x32xf32>
    %139 = math.tanh %138 : vector<8x32xf32>
    %140 = arith.mulf %135, %139 : vector<8x32xf32>
    %141 = vector.extract_strided_slice %16 {offsets = [24, 0], sizes = [8, 128], strides = [1, 1]} : vector<64x128xf32> to vector<8x128xf32>
    %cst_35 = arith.constant dense<0.000000e+00> : vector<8x128xf32>
    %142 = tpu.matmul %119, %10, %cst_35 {dimension_numbers = #tpu.dot_dimension_numbers<[1], [0], [0], [1], [0, 0, 1, 1], [], []>} : vector<8x32xf32>, vector<32x128xf32>, vector<8x128xf32> -> vector<8x128xf32>
    %143 = arith.addf %141, %142 : vector<8x128xf32>
    %144 = vector.extract_strided_slice %143 {offsets = [0, 0], sizes = [8, 96], strides = [1, 1]} : vector<8x128xf32> to vector<8x96xf32>
    %145 = arith.negf %144 : vector<8x96xf32>
    %146 = math.exp %145 : vector<8x96xf32>
    %cst_36 = arith.constant 1.000000e+00 : f32
    %147 = vector.broadcast %cst_36 : f32 to vector<8x96xf32>
    %148 = arith.addf %147, %146 : vector<8x96xf32>
    %149 = arith.divf %147, %148 : vector<8x96xf32>
    %150 = vector.extract_strided_slice %143 {offsets = [0, 96], sizes = [8, 32], strides = [1, 1]} : vector<8x128xf32> to vector<8x32xf32>
    %151 = math.tanh %150 : vector<8x32xf32>
    %152 = vector.extract_strided_slice %149 {offsets = [0, 0], sizes = [8, 32], strides = [1, 1]} : vector<8x96xf32> to vector<8x32xf32>
    %153 = vector.extract_strided_slice %149 {offsets = [0, 32], sizes = [8, 32], strides = [1, 1]} : vector<8x96xf32> to vector<8x32xf32>
    %154 = vector.extract_strided_slice %149 {offsets = [0, 64], sizes = [8, 32], strides = [1, 1]} : vector<8x96xf32> to vector<8x32xf32>
    %155 = arith.mulf %153, %117 : vector<8x32xf32>
    %156 = arith.mulf %152, %151 : vector<8x32xf32>
    %157 = arith.addf %155, %156 : vector<8x32xf32>
    %158 = math.tanh %157 : vector<8x32xf32>
    %159 = arith.mulf %154, %158 : vector<8x32xf32>
    %cst_37 = arith.constant dense<0.000000e+00> : vector<8x128xf32>
    %160 = tpu.matmul %159, %9, %cst_37 {dimension_numbers = #tpu.dot_dimension_numbers<[1], [0], [0], [1], [0, 0, 1, 1], [], []>} : vector<8x32xf32>, vector<32x128xf32>, vector<8x128xf32> -> vector<8x128xf32>
    %161 = vector.broadcast %13 : vector<1x128xf32> to vector<8x128xf32>
    %162 = arith.addf %160, %161 : vector<8x128xf32>
    %cst_38 = arith.constant dense<0.000000e+00> : vector<8x128xf32>
    %163 = tpu.matmul %140, %11, %cst_38 {dimension_numbers = #tpu.dot_dimension_numbers<[1], [0], [0], [1], [0, 0, 1, 1], [], []>} : vector<8x32xf32>, vector<32x128xf32>, vector<8x128xf32> -> vector<8x128xf32>
    %164 = arith.addf %162, %163 : vector<8x128xf32>
    %165 = vector.extract_strided_slice %164 {offsets = [0, 0], sizes = [8, 96], strides = [1, 1]} : vector<8x128xf32> to vector<8x96xf32>
    %166 = arith.negf %165 : vector<8x96xf32>
    %167 = math.exp %166 : vector<8x96xf32>
    %cst_39 = arith.constant 1.000000e+00 : f32
    %168 = vector.broadcast %cst_39 : f32 to vector<8x96xf32>
    %169 = arith.addf %168, %167 : vector<8x96xf32>
    %170 = arith.divf %168, %169 : vector<8x96xf32>
    %171 = vector.extract_strided_slice %164 {offsets = [0, 96], sizes = [8, 32], strides = [1, 1]} : vector<8x128xf32> to vector<8x32xf32>
    %172 = math.tanh %171 : vector<8x32xf32>
    %173 = vector.extract_strided_slice %170 {offsets = [0, 0], sizes = [8, 32], strides = [1, 1]} : vector<8x96xf32> to vector<8x32xf32>
    %174 = vector.extract_strided_slice %170 {offsets = [0, 32], sizes = [8, 32], strides = [1, 1]} : vector<8x96xf32> to vector<8x32xf32>
    %175 = vector.extract_strided_slice %170 {offsets = [0, 64], sizes = [8, 32], strides = [1, 1]} : vector<8x96xf32> to vector<8x32xf32>
    %176 = arith.mulf %174, %138 : vector<8x32xf32>
    %177 = arith.mulf %173, %172 : vector<8x32xf32>
    %178 = arith.addf %176, %177 : vector<8x32xf32>
    %179 = math.tanh %178 : vector<8x32xf32>
    %180 = arith.mulf %175, %179 : vector<8x32xf32>
    %181 = vector.extract_strided_slice %16 {offsets = [32, 0], sizes = [8, 128], strides = [1, 1]} : vector<64x128xf32> to vector<8x128xf32>
    %cst_40 = arith.constant dense<0.000000e+00> : vector<8x128xf32>
    %182 = tpu.matmul %159, %10, %cst_40 {dimension_numbers = #tpu.dot_dimension_numbers<[1], [0], [0], [1], [0, 0, 1, 1], [], []>} : vector<8x32xf32>, vector<32x128xf32>, vector<8x128xf32> -> vector<8x128xf32>
    %183 = arith.addf %181, %182 : vector<8x128xf32>
    %184 = vector.extract_strided_slice %183 {offsets = [0, 0], sizes = [8, 96], strides = [1, 1]} : vector<8x128xf32> to vector<8x96xf32>
    %185 = arith.negf %184 : vector<8x96xf32>
    %186 = math.exp %185 : vector<8x96xf32>
    %cst_41 = arith.constant 1.000000e+00 : f32
    %187 = vector.broadcast %cst_41 : f32 to vector<8x96xf32>
    %188 = arith.addf %187, %186 : vector<8x96xf32>
    %189 = arith.divf %187, %188 : vector<8x96xf32>
    %190 = vector.extract_strided_slice %183 {offsets = [0, 96], sizes = [8, 32], strides = [1, 1]} : vector<8x128xf32> to vector<8x32xf32>
    %191 = math.tanh %190 : vector<8x32xf32>
    %192 = vector.extract_strided_slice %189 {offsets = [0, 0], sizes = [8, 32], strides = [1, 1]} : vector<8x96xf32> to vector<8x32xf32>
    %193 = vector.extract_strided_slice %189 {offsets = [0, 32], sizes = [8, 32], strides = [1, 1]} : vector<8x96xf32> to vector<8x32xf32>
    %194 = vector.extract_strided_slice %189 {offsets = [0, 64], sizes = [8, 32], strides = [1, 1]} : vector<8x96xf32> to vector<8x32xf32>
    %195 = arith.mulf %193, %157 : vector<8x32xf32>
    %196 = arith.mulf %192, %191 : vector<8x32xf32>
    %197 = arith.addf %195, %196 : vector<8x32xf32>
    %198 = math.tanh %197 : vector<8x32xf32>
    %199 = arith.mulf %194, %198 : vector<8x32xf32>
    %cst_42 = arith.constant dense<0.000000e+00> : vector<8x128xf32>
    %200 = tpu.matmul %199, %9, %cst_42 {dimension_numbers = #tpu.dot_dimension_numbers<[1], [0], [0], [1], [0, 0, 1, 1], [], []>} : vector<8x32xf32>, vector<32x128xf32>, vector<8x128xf32> -> vector<8x128xf32>
    %201 = vector.broadcast %13 : vector<1x128xf32> to vector<8x128xf32>
    %202 = arith.addf %200, %201 : vector<8x128xf32>
    %cst_43 = arith.constant dense<0.000000e+00> : vector<8x128xf32>
    %203 = tpu.matmul %180, %11, %cst_43 {dimension_numbers = #tpu.dot_dimension_numbers<[1], [0], [0], [1], [0, 0, 1, 1], [], []>} : vector<8x32xf32>, vector<32x128xf32>, vector<8x128xf32> -> vector<8x128xf32>
    %204 = arith.addf %202, %203 : vector<8x128xf32>
    %205 = vector.extract_strided_slice %204 {offsets = [0, 0], sizes = [8, 96], strides = [1, 1]} : vector<8x128xf32> to vector<8x96xf32>
    %206 = arith.negf %205 : vector<8x96xf32>
    %207 = math.exp %206 : vector<8x96xf32>
    %cst_44 = arith.constant 1.000000e+00 : f32
    %208 = vector.broadcast %cst_44 : f32 to vector<8x96xf32>
    %209 = arith.addf %208, %207 : vector<8x96xf32>
    %210 = arith.divf %208, %209 : vector<8x96xf32>
    %211 = vector.extract_strided_slice %204 {offsets = [0, 96], sizes = [8, 32], strides = [1, 1]} : vector<8x128xf32> to vector<8x32xf32>
    %212 = math.tanh %211 : vector<8x32xf32>
    %213 = vector.extract_strided_slice %210 {offsets = [0, 0], sizes = [8, 32], strides = [1, 1]} : vector<8x96xf32> to vector<8x32xf32>
    %214 = vector.extract_strided_slice %210 {offsets = [0, 32], sizes = [8, 32], strides = [1, 1]} : vector<8x96xf32> to vector<8x32xf32>
    %215 = vector.extract_strided_slice %210 {offsets = [0, 64], sizes = [8, 32], strides = [1, 1]} : vector<8x96xf32> to vector<8x32xf32>
    %216 = arith.mulf %214, %178 : vector<8x32xf32>
    %217 = arith.mulf %213, %212 : vector<8x32xf32>
    %218 = arith.addf %216, %217 : vector<8x32xf32>
    %219 = math.tanh %218 : vector<8x32xf32>
    %220 = arith.mulf %215, %219 : vector<8x32xf32>
    %221 = vector.extract_strided_slice %16 {offsets = [40, 0], sizes = [8, 128], strides = [1, 1]} : vector<64x128xf32> to vector<8x128xf32>
    %cst_45 = arith.constant dense<0.000000e+00> : vector<8x128xf32>
    %222 = tpu.matmul %199, %10, %cst_45 {dimension_numbers = #tpu.dot_dimension_numbers<[1], [0], [0], [1], [0, 0, 1, 1], [], []>} : vector<8x32xf32>, vector<32x128xf32>, vector<8x128xf32> -> vector<8x128xf32>
    %223 = arith.addf %221, %222 : vector<8x128xf32>
    %224 = vector.extract_strided_slice %223 {offsets = [0, 0], sizes = [8, 96], strides = [1, 1]} : vector<8x128xf32> to vector<8x96xf32>
    %225 = arith.negf %224 : vector<8x96xf32>
    %226 = math.exp %225 : vector<8x96xf32>
    %cst_46 = arith.constant 1.000000e+00 : f32
    %227 = vector.broadcast %cst_46 : f32 to vector<8x96xf32>
    %228 = arith.addf %227, %226 : vector<8x96xf32>
    %229 = arith.divf %227, %228 : vector<8x96xf32>
    %230 = vector.extract_strided_slice %223 {offsets = [0, 96], sizes = [8, 32], strides = [1, 1]} : vector<8x128xf32> to vector<8x32xf32>
    %231 = math.tanh %230 : vector<8x32xf32>
    %232 = vector.extract_strided_slice %229 {offsets = [0, 0], sizes = [8, 32], strides = [1, 1]} : vector<8x96xf32> to vector<8x32xf32>
    %233 = vector.extract_strided_slice %229 {offsets = [0, 32], sizes = [8, 32], strides = [1, 1]} : vector<8x96xf32> to vector<8x32xf32>
    %234 = vector.extract_strided_slice %229 {offsets = [0, 64], sizes = [8, 32], strides = [1, 1]} : vector<8x96xf32> to vector<8x32xf32>
    %235 = arith.mulf %233, %197 : vector<8x32xf32>
    %236 = arith.mulf %232, %231 : vector<8x32xf32>
    %237 = arith.addf %235, %236 : vector<8x32xf32>
    %238 = math.tanh %237 : vector<8x32xf32>
    %239 = arith.mulf %234, %238 : vector<8x32xf32>
    %cst_47 = arith.constant dense<0.000000e+00> : vector<8x128xf32>
    %240 = tpu.matmul %239, %9, %cst_47 {dimension_numbers = #tpu.dot_dimension_numbers<[1], [0], [0], [1], [0, 0, 1, 1], [], []>} : vector<8x32xf32>, vector<32x128xf32>, vector<8x128xf32> -> vector<8x128xf32>
    %241 = vector.broadcast %13 : vector<1x128xf32> to vector<8x128xf32>
    %242 = arith.addf %240, %241 : vector<8x128xf32>
    %cst_48 = arith.constant dense<0.000000e+00> : vector<8x128xf32>
    %243 = tpu.matmul %220, %11, %cst_48 {dimension_numbers = #tpu.dot_dimension_numbers<[1], [0], [0], [1], [0, 0, 1, 1], [], []>} : vector<8x32xf32>, vector<32x128xf32>, vector<8x128xf32> -> vector<8x128xf32>
    %244 = arith.addf %242, %243 : vector<8x128xf32>
    %245 = vector.extract_strided_slice %244 {offsets = [0, 0], sizes = [8, 96], strides = [1, 1]} : vector<8x128xf32> to vector<8x96xf32>
    %246 = arith.negf %245 : vector<8x96xf32>
    %247 = math.exp %246 : vector<8x96xf32>
    %cst_49 = arith.constant 1.000000e+00 : f32
    %248 = vector.broadcast %cst_49 : f32 to vector<8x96xf32>
    %249 = arith.addf %248, %247 : vector<8x96xf32>
    %250 = arith.divf %248, %249 : vector<8x96xf32>
    %251 = vector.extract_strided_slice %244 {offsets = [0, 96], sizes = [8, 32], strides = [1, 1]} : vector<8x128xf32> to vector<8x32xf32>
    %252 = math.tanh %251 : vector<8x32xf32>
    %253 = vector.extract_strided_slice %250 {offsets = [0, 0], sizes = [8, 32], strides = [1, 1]} : vector<8x96xf32> to vector<8x32xf32>
    %254 = vector.extract_strided_slice %250 {offsets = [0, 32], sizes = [8, 32], strides = [1, 1]} : vector<8x96xf32> to vector<8x32xf32>
    %255 = vector.extract_strided_slice %250 {offsets = [0, 64], sizes = [8, 32], strides = [1, 1]} : vector<8x96xf32> to vector<8x32xf32>
    %256 = arith.mulf %254, %218 : vector<8x32xf32>
    %257 = arith.mulf %253, %252 : vector<8x32xf32>
    %258 = arith.addf %256, %257 : vector<8x32xf32>
    %259 = math.tanh %258 : vector<8x32xf32>
    %260 = arith.mulf %255, %259 : vector<8x32xf32>
    %261 = vector.extract_strided_slice %16 {offsets = [48, 0], sizes = [8, 128], strides = [1, 1]} : vector<64x128xf32> to vector<8x128xf32>
    %cst_50 = arith.constant dense<0.000000e+00> : vector<8x128xf32>
    %262 = tpu.matmul %239, %10, %cst_50 {dimension_numbers = #tpu.dot_dimension_numbers<[1], [0], [0], [1], [0, 0, 1, 1], [], []>} : vector<8x32xf32>, vector<32x128xf32>, vector<8x128xf32> -> vector<8x128xf32>
    %263 = arith.addf %261, %262 : vector<8x128xf32>
    %264 = vector.extract_strided_slice %263 {offsets = [0, 0], sizes = [8, 96], strides = [1, 1]} : vector<8x128xf32> to vector<8x96xf32>
    %265 = arith.negf %264 : vector<8x96xf32>
    %266 = math.exp %265 : vector<8x96xf32>
    %cst_51 = arith.constant 1.000000e+00 : f32
    %267 = vector.broadcast %cst_51 : f32 to vector<8x96xf32>
    %268 = arith.addf %267, %266 : vector<8x96xf32>
    %269 = arith.divf %267, %268 : vector<8x96xf32>
    %270 = vector.extract_strided_slice %263 {offsets = [0, 96], sizes = [8, 32], strides = [1, 1]} : vector<8x128xf32> to vector<8x32xf32>
    %271 = math.tanh %270 : vector<8x32xf32>
    %272 = vector.extract_strided_slice %269 {offsets = [0, 0], sizes = [8, 32], strides = [1, 1]} : vector<8x96xf32> to vector<8x32xf32>
    %273 = vector.extract_strided_slice %269 {offsets = [0, 32], sizes = [8, 32], strides = [1, 1]} : vector<8x96xf32> to vector<8x32xf32>
    %274 = vector.extract_strided_slice %269 {offsets = [0, 64], sizes = [8, 32], strides = [1, 1]} : vector<8x96xf32> to vector<8x32xf32>
    %275 = arith.mulf %273, %237 : vector<8x32xf32>
    %276 = arith.mulf %272, %271 : vector<8x32xf32>
    %277 = arith.addf %275, %276 : vector<8x32xf32>
    %278 = math.tanh %277 : vector<8x32xf32>
    %279 = arith.mulf %274, %278 : vector<8x32xf32>
    %cst_52 = arith.constant dense<0.000000e+00> : vector<8x128xf32>
    %280 = tpu.matmul %279, %9, %cst_52 {dimension_numbers = #tpu.dot_dimension_numbers<[1], [0], [0], [1], [0, 0, 1, 1], [], []>} : vector<8x32xf32>, vector<32x128xf32>, vector<8x128xf32> -> vector<8x128xf32>
    %281 = vector.broadcast %13 : vector<1x128xf32> to vector<8x128xf32>
    %282 = arith.addf %280, %281 : vector<8x128xf32>
    %cst_53 = arith.constant dense<0.000000e+00> : vector<8x128xf32>
    %283 = tpu.matmul %260, %11, %cst_53 {dimension_numbers = #tpu.dot_dimension_numbers<[1], [0], [0], [1], [0, 0, 1, 1], [], []>} : vector<8x32xf32>, vector<32x128xf32>, vector<8x128xf32> -> vector<8x128xf32>
    %284 = arith.addf %282, %283 : vector<8x128xf32>
    %285 = vector.extract_strided_slice %284 {offsets = [0, 0], sizes = [8, 96], strides = [1, 1]} : vector<8x128xf32> to vector<8x96xf32>
    %286 = arith.negf %285 : vector<8x96xf32>
    %287 = math.exp %286 : vector<8x96xf32>
    %cst_54 = arith.constant 1.000000e+00 : f32
    %288 = vector.broadcast %cst_54 : f32 to vector<8x96xf32>
    %289 = arith.addf %288, %287 : vector<8x96xf32>
    %290 = arith.divf %288, %289 : vector<8x96xf32>
    %291 = vector.extract_strided_slice %284 {offsets = [0, 96], sizes = [8, 32], strides = [1, 1]} : vector<8x128xf32> to vector<8x32xf32>
    %292 = math.tanh %291 : vector<8x32xf32>
    %293 = vector.extract_strided_slice %290 {offsets = [0, 0], sizes = [8, 32], strides = [1, 1]} : vector<8x96xf32> to vector<8x32xf32>
    %294 = vector.extract_strided_slice %290 {offsets = [0, 32], sizes = [8, 32], strides = [1, 1]} : vector<8x96xf32> to vector<8x32xf32>
    %295 = vector.extract_strided_slice %290 {offsets = [0, 64], sizes = [8, 32], strides = [1, 1]} : vector<8x96xf32> to vector<8x32xf32>
    %296 = arith.mulf %294, %258 : vector<8x32xf32>
    %297 = arith.mulf %293, %292 : vector<8x32xf32>
    %298 = arith.addf %296, %297 : vector<8x32xf32>
    %299 = math.tanh %298 : vector<8x32xf32>
    %300 = arith.mulf %295, %299 : vector<8x32xf32>
    %301 = vector.extract_strided_slice %16 {offsets = [56, 0], sizes = [8, 128], strides = [1, 1]} : vector<64x128xf32> to vector<8x128xf32>
    %cst_55 = arith.constant dense<0.000000e+00> : vector<8x128xf32>
    %302 = tpu.matmul %279, %10, %cst_55 {dimension_numbers = #tpu.dot_dimension_numbers<[1], [0], [0], [1], [0, 0, 1, 1], [], []>} : vector<8x32xf32>, vector<32x128xf32>, vector<8x128xf32> -> vector<8x128xf32>
    %303 = arith.addf %301, %302 : vector<8x128xf32>
    %304 = vector.extract_strided_slice %303 {offsets = [0, 0], sizes = [8, 96], strides = [1, 1]} : vector<8x128xf32> to vector<8x96xf32>
    %305 = arith.negf %304 : vector<8x96xf32>
    %306 = math.exp %305 : vector<8x96xf32>
    %cst_56 = arith.constant 1.000000e+00 : f32
    %307 = vector.broadcast %cst_56 : f32 to vector<8x96xf32>
    %308 = arith.addf %307, %306 : vector<8x96xf32>
    %309 = arith.divf %307, %308 : vector<8x96xf32>
    %310 = vector.extract_strided_slice %303 {offsets = [0, 96], sizes = [8, 32], strides = [1, 1]} : vector<8x128xf32> to vector<8x32xf32>
    %311 = math.tanh %310 : vector<8x32xf32>
    %312 = vector.extract_strided_slice %309 {offsets = [0, 0], sizes = [8, 32], strides = [1, 1]} : vector<8x96xf32> to vector<8x32xf32>
    %313 = vector.extract_strided_slice %309 {offsets = [0, 32], sizes = [8, 32], strides = [1, 1]} : vector<8x96xf32> to vector<8x32xf32>
    %314 = vector.extract_strided_slice %309 {offsets = [0, 64], sizes = [8, 32], strides = [1, 1]} : vector<8x96xf32> to vector<8x32xf32>
    %315 = arith.mulf %313, %277 : vector<8x32xf32>
    %316 = arith.mulf %312, %311 : vector<8x32xf32>
    %317 = arith.addf %315, %316 : vector<8x32xf32>
    %318 = math.tanh %317 : vector<8x32xf32>
    %319 = arith.mulf %314, %318 : vector<8x32xf32>
    %cst_57 = arith.constant dense<0.000000e+00> : vector<8x128xf32>
    %320 = tpu.matmul %319, %9, %cst_57 {dimension_numbers = #tpu.dot_dimension_numbers<[1], [0], [0], [1], [0, 0, 1, 1], [], []>} : vector<8x32xf32>, vector<32x128xf32>, vector<8x128xf32> -> vector<8x128xf32>
    %321 = vector.broadcast %13 : vector<1x128xf32> to vector<8x128xf32>
    %322 = arith.addf %320, %321 : vector<8x128xf32>
    %cst_58 = arith.constant dense<0.000000e+00> : vector<8x128xf32>
    %323 = tpu.matmul %300, %11, %cst_58 {dimension_numbers = #tpu.dot_dimension_numbers<[1], [0], [0], [1], [0, 0, 1, 1], [], []>} : vector<8x32xf32>, vector<32x128xf32>, vector<8x128xf32> -> vector<8x128xf32>
    %324 = arith.addf %322, %323 : vector<8x128xf32>
    %325 = vector.extract_strided_slice %324 {offsets = [0, 0], sizes = [8, 96], strides = [1, 1]} : vector<8x128xf32> to vector<8x96xf32>
    %326 = arith.negf %325 : vector<8x96xf32>
    %327 = math.exp %326 : vector<8x96xf32>
    %cst_59 = arith.constant 1.000000e+00 : f32
    %328 = vector.broadcast %cst_59 : f32 to vector<8x96xf32>
    %329 = arith.addf %328, %327 : vector<8x96xf32>
    %330 = arith.divf %328, %329 : vector<8x96xf32>
    %331 = vector.extract_strided_slice %324 {offsets = [0, 96], sizes = [8, 32], strides = [1, 1]} : vector<8x128xf32> to vector<8x32xf32>
    %332 = math.tanh %331 : vector<8x32xf32>
    %333 = vector.extract_strided_slice %330 {offsets = [0, 0], sizes = [8, 32], strides = [1, 1]} : vector<8x96xf32> to vector<8x32xf32>
    %334 = vector.extract_strided_slice %330 {offsets = [0, 32], sizes = [8, 32], strides = [1, 1]} : vector<8x96xf32> to vector<8x32xf32>
    %335 = vector.extract_strided_slice %330 {offsets = [0, 64], sizes = [8, 32], strides = [1, 1]} : vector<8x96xf32> to vector<8x32xf32>
    %336 = arith.mulf %334, %298 : vector<8x32xf32>
    %337 = arith.mulf %333, %332 : vector<8x32xf32>
    %338 = arith.addf %336, %337 : vector<8x32xf32>
    %339 = math.tanh %338 : vector<8x32xf32>
    %340 = arith.mulf %335, %339 : vector<8x32xf32>
    %c0_60 = arith.constant 0 : index
    %c0_61 = arith.constant 0 : index
    %341 = vector.load %arg8[%c0_60, %c0_61] : memref<1x32xf32, #tpu.memory_space<vmem>>, vector<1x32xf32>
    %342 = vector.broadcast %341 : vector<1x32xf32> to vector<8x32xf32>
    %343 = arith.mulf %340, %342 : vector<8x32xf32>
    %cst_62 = arith.constant dense<0.000000e+00> : vector<8xf32>
    %344 = vector.multi_reduction <add>, %343, %cst_62 [1] : vector<8x32xf32> to vector<8xf32>
    %345 = vector.shape_cast %344 : vector<8xf32> to vector<8x1xf32>
    %c0_63 = arith.constant 0 : index
    %c0_64 = arith.constant 0 : index
    %346 = vector.load %arg9[%c0_63, %c0_64] : memref<1x1xf32, #tpu.memory_space<vmem>>, vector<1x1xf32>
    %347 = vector.broadcast %346 : vector<1x1xf32> to vector<8x1xf32>
    %348 = arith.addf %345, %347 : vector<8x1xf32>
    %349 = arith.negf %348 : vector<8x1xf32>
    %350 = math.exp %349 : vector<8x1xf32>
    %cst_65 = arith.constant 1.000000e+00 : f32
    %351 = vector.broadcast %cst_65 : f32 to vector<8x1xf32>
    %352 = arith.addf %351, %350 : vector<8x1xf32>
    %353 = arith.divf %351, %352 : vector<8x1xf32>
    %c0_66 = arith.constant 0 : index
    %c0_67 = arith.constant 0 : index
    %354 = vector.load %arg10[%c0_66, %c0_67] : memref<8x1xf32, #tpu.memory_space<vmem>>, vector<8x1xf32>
    tpu.vector_store %arg10[%c0_66, %c0_67], %353 {strides = array<i32>} : memref<8x1xf32, #tpu.memory_space<vmem>>, vector<8x1xf32>,
    return
  }
}

</mosaic_0001>

<llo_original>
// kernel: tpu_custom_call.1
$region0: #{tpu_custom_call.1}
  #allocation0 [shape = 'u32[]', space=smem, size = 0x4, offset = 0x4, fixed_abs, tag = 'smem constant byte address 0x4 - core index']
  #allocation1 [shape = 'u32[144,128]{1,0:T(1,128)}', space=vmem, size = 0x12000, scoped, tag = 'internal scratch']
  #allocation2 [shape = 'f32[1,1]{1,0:T(1,128)S(1)}', space=vmem, size = 0x200, scoped, tag = 'scoped memory for tpu_custom_call.1']
  %s0 = inlined_call_operand.vmem [shape: s32[64,1], index: 0, kind: input, shape index: {}]
  %s1 = inlined_call_operand.vmem [shape: f32[64,32], index: 1, kind: input, shape index: {}]
  %s2 = inlined_call_operand.vmem [shape: f32[32,128], index: 2, kind: input, shape index: {}]
  %s3 = inlined_call_operand.vmem [shape: f32[32,128], index: 3, kind: input, shape index: {}]
  %s4 = inlined_call_operand.vmem [shape: f32[1,128], index: 4, kind: input, shape index: {}]
  %s5 = inlined_call_operand.vmem [shape: f32[32,128], index: 5, kind: input, shape index: {}]
  %s6 = inlined_call_operand.vmem [shape: f32[32,128], index: 6, kind: input, shape index: {}]
  %s7 = inlined_call_operand.vmem [shape: f32[1,128], index: 7, kind: input, shape index: {}]
  %s8 = inlined_call_operand.vmem [shape: f32[1,32], index: 8, kind: input, shape index: {}]
  %s9 = inlined_call_operand.<no memory space> [shape: f32[1,1], index: 9, kind: input, shape index: {}]
  %s10 = inlined_call_operand.vmem [shape: f32[8,1], index: 10, kind: output, shape index: {}]
  %s11 = sld [smem:[#allocation0]]
  $region50: #{tpu_custom_call.1} parent=0
    _
  %s13 = ssub.s32 1, %s11
  %s14 = scalar_select 0, %s13, %s11
  %v15 = vstv %s9
  %16 = vst [vmem:[#allocation2] sm:$0x1] %v15
  // Predicated region
  $region2: #{tpu_custom_call.1} parent=0 // pred_check
    _
  $region3: #{tpu_custom_call.1} parent=0 // pred_check_branch
    %18 = sbr.rel (0) target = $region5
  $region4: #{tpu_custom_call.1} parent=0 // pred_region
    _
  $region5: #{tpu_custom_call.1} parent=0 // pred_fallthru
    _
  // Predicated region
  $region6: #{tpu_custom_call.1} parent=0 // pred_check
    _
  $region7: #{tpu_custom_call.1} parent=0 // pred_check_branch
    %20 = sbr.rel (0) target = $region9
  $region8: #{tpu_custom_call.1} parent=0 // pred_region
    _
  $region9: #{tpu_custom_call.1} parent=0 // pred_fallthru
    _
  // Predicated region
  $region10: #{tpu_custom_call.1} parent=0 // pred_check
    _
  $region11: #{tpu_custom_call.1} parent=0 // pred_check_branch
    %22 = sbr.rel (0) target = $region13
  $region12: #{tpu_custom_call.1} parent=0 // pred_region
    _
  $region13: #{tpu_custom_call.1} parent=0 // pred_fallthru
    _
  // Predicated region
  $region14: #{tpu_custom_call.1} parent=0 // pred_check
    _
  $region15: #{tpu_custom_call.1} parent=0 // pred_check_branch
    %24 = sbr.rel (0) target = $region17
  $region16: #{tpu_custom_call.1} parent=0 // pred_region
    _
  $region17: #{tpu_custom_call.1} parent=0 // pred_fallthru
    _
  // Predicated region
  $region18: #{tpu_custom_call.1} parent=0 // pred_check
    _
  $region19: #{tpu_custom_call.1} parent=0 // pred_check_branch
    %26 = sbr.rel (0) target = $region21
  $region20: #{tpu_custom_call.1} parent=0 // pred_region
    _
  $region21: #{tpu_custom_call.1} parent=0 // pred_fallthru
    _
  // Predicated region
  $region22: #{tpu_custom_call.1} parent=0 // pred_check
    _
  $region23: #{tpu_custom_call.1} parent=0 // pred_check_branch
    %28 = sbr.rel (0) target = $region25
  $region24: #{tpu_custom_call.1} parent=0 // pred_region
    _
  $region25: #{tpu_custom_call.1} parent=0 // pred_fallthru
    _
  // Predicated region
  $region26: #{tpu_custom_call.1} parent=0 // pred_check
    _
  $region27: #{tpu_custom_call.1} parent=0 // pred_check_branch
    %30 = sbr.rel (0) target = $region29
  $region28: #{tpu_custom_call.1} parent=0 // pred_region
    _
  $region29: #{tpu_custom_call.1} parent=0 // pred_fallthru
    _
  // Predicated region
  $region30: #{tpu_custom_call.1} parent=0 // pred_check
    _
  $region31: #{tpu_custom_call.1} parent=0 // pred_check_branch
    %32 = sbr.rel (0) target = $region33
  $region32: #{tpu_custom_call.1} parent=0 // pred_region
    _
  $region33: #{tpu_custom_call.1} parent=0 // pred_fallthru
    _
  // Predicated region
  $region34: #{tpu_custom_call.1} parent=0 // pred_check
    _
  $region35: #{tpu_custom_call.1} parent=0 // pred_check_branch
    %34 = sbr.rel (0) target = $region37
  $region36: #{tpu_custom_call.1} parent=0 // pred_region
    _
  $region37: #{tpu_custom_call.1} parent=0 // pred_fallthru
    _
  // Predicated region
  $region38: #{tpu_custom_call.1} parent=0 // pred_check
    _
  $region39: #{tpu_custom_call.1} parent=0 // pred_check_branch
    %36 = sbr.rel (0) target = $region41
  $region40: #{tpu_custom_call.1} parent=0 // pred_region
    _
  $region41: #{tpu_custom_call.1} parent=0 // pred_fallthru
    _
  %v37 = vld [vmem:[%s0] sm:$0xff]
  %v38 = vld [vmem:[%s0 + $0x8] sm:$0xff]
  %v39 = vld [vmem:[%s0 + $0x10] sm:$0xff]
  %v40 = vld [vmem:[%s0 + $0x18] sm:$0xff]
  %v41 = vld [vmem:[%s0 + $0x20] sm:$0xff]
  %v42 = vld [vmem:[%s0 + $0x28] sm:$0xff]
  %v43 = vld [vmem:[%s0 + $0x30] sm:$0xff]
  %v44 = vld [vmem:[%s0 + $0x38] sm:$0xff]
  %v45 = vlaneseq
  %v46 = vand.u32 %v45, 127
  %47 = vset.pattern.permute.xlu0 0
  %48 = vperm.xlu0 %47, %v37
  %v49 = vpop.permute.xlu0 %48
  %50 = vset.pattern.permute.xlu0 0
  %51 = vperm.xlu0 %50, %v38
  %v52 = vpop.permute.xlu0 %51
  %53 = vset.pattern.permute.xlu0 0
  %54 = vperm.xlu0 %53, %v39
  %v55 = vpop.permute.xlu0 %54
  %56 = vset.pattern.permute.xlu0 0
  %57 = vperm.xlu0 %56, %v40
  %v58 = vpop.permute.xlu0 %57
  %59 = vset.pattern.permute.xlu0 0
  %60 = vperm.xlu0 %59, %v41
  %v61 = vpop.permute.xlu0 %60
  %62 = vset.pattern.permute.xlu0 0
  %63 = vperm.xlu0 %62, %v42
  %v64 = vpop.permute.xlu0 %63
  %65 = vset.pattern.permute.xlu0 0
  %66 = vperm.xlu0 %65, %v43
  %v67 = vpop.permute.xlu0 %66
  %68 = vset.pattern.permute.xlu0 0
  %69 = vperm.xlu0 %68, %v44
  %v70 = vpop.permute.xlu0 %69
  %vm71 = vcmp.eq.s32.totalorder %v49, %v46
  %vm72 = vcmp.eq.s32.totalorder %v52, %v46
  %vm73 = vcmp.eq.s32.totalorder %v55, %v46
  %vm74 = vcmp.eq.s32.totalorder %v58, %v46
  %vm75 = vcmp.eq.s32.totalorder %v61, %v46
  %vm76 = vcmp.eq.s32.totalorder %v64, %v46
  %vm77 = vcmp.eq.s32.totalorder %v67, %v46
  %vm78 = vcmp.eq.s32.totalorder %v70, %v46
  %v79 = vsel %vm71, 1, 0
  %v80 = vsel %vm72, 1, 0
  %v81 = vsel %vm73, 1, 0
  %v82 = vsel %vm74, 1, 0
  %v83 = vsel %vm75, 1, 0
  %v84 = vsel %vm76, 1, 0
  %v85 = vsel %vm77, 1, 0
  %v86 = vsel %vm78, 1, 0
  %v87 = vcvt.s32.f32 %v79
  %v88 = vcvt.s32.f32 %v80
  %v89 = vcvt.s32.f32 %v81
  %v90 = vcvt.s32.f32 %v82
  %v91 = vcvt.s32.f32 %v83
  %v92 = vcvt.s32.f32 %v84
  %v93 = vcvt.s32.f32 %v85
  %v94 = vcvt.s32.f32 %v86
  %v95 = vld [vmem:[%s1] sm:$0xff]
  %v96 = vld [vmem:[%s1 + $0x8] sm:$0xff]
  %v97 = vld [vmem:[%s1 + $0x10] sm:$0xff]
  %v98 = vld [vmem:[%s1 + $0x18] sm:$0xff]
  %v99 = vld [vmem:[%s1 + $0x20] sm:$0xff]
  %v100 = vld [vmem:[%s1 + $0x28] sm:$0xff]
  %v101 = vld [vmem:[%s1 + $0x30] sm:$0xff]
  %v102 = vld [vmem:[%s1 + $0x38] sm:$0xff]
  %vm103 = vcmask 523264
  %v105 = vsel %vm103, %v87, 0
  %v108 = vsel %vm103, %v88, 0
  %v111 = vsel %vm103, %v89, 0
  %v114 = vsel %vm103, %v90, 0
  %v117 = vsel %vm103, %v91, 0
  %v120 = vsel %vm103, %v92, 0
  %v123 = vsel %vm103, %v93, 0
  %v126 = vsel %vm103, %v94, 0
  %128 = vmatprep.subr.mxu0 0.0
  %129 = vmatpush1.msra.mxu0 %v95
  %130 = vmatprep.subr.mxu0 0.0
  %131 = vmatpush1.msra.mxu0 %v96
  %132 = vmatprep.subr.mxu0 0.0
  %133 = vmatpush1.msra.mxu0 %v97
  %134 = vmatprep.subr.mxu0 0.0
  %135 = vmatpush1.msra.mxu0 %v98
  %136 = vmatprep.subr.mxu0 0.0
  %137 = vmatpush1.msra.mxu0 %v99
  %138 = vmatprep.subr.mxu0 0.0
  %139 = vmatpush1.msra.mxu0 %v100
  %140 = vmatprep.subr.mxu0 0.0
  %141 = vmatpush1.msra.mxu0 %v101
  %142 = vmatprep.subr.mxu0 0.0
  %143 = vmatpush1.msra.mxu0 %v102
  %144 = vmatprep.subr.mxu0 0.0
  %145 = vmatpush1.msra.mxu0 0.0
  %146 = vmatprep.subr.mxu0 0.0
  %147 = vmatpush1.msra.mxu0 0.0
  %148 = vmatprep.subr.mxu0 0.0
  %149 = vmatpush1.msra.mxu0 0.0
  %150 = vmatprep.subr.mxu0 0.0
  %151 = vmatpush1.msra.mxu0 0.0
  %152 = vmatprep.subr.mxu0 0.0
  %153 = vmatpush1.msra.mxu0 0.0
  %154 = vmatprep.subr.mxu0 0.0
  %155 = vmatpush1.msra.mxu0 0.0
  %156 = vmatprep.subr.mxu0 0.0
  %157 = vmatpush1.msra.mxu0 0.0
  %158 = vmatprep.subr.mxu0 0.0
  %159 = vmatpush1.msra.mxu0 0.0
  %160 = vmatprep.subr.mxu0 0.0
  %161 = vmatpush1.msra.mxu0 0.0
  %162 = vmatprep.subr.mxu0 0.0
  %163 = vmatpush1.msra.mxu0 0.0
  %164 = vmatprep.subr.mxu0 0.0
  %165 = vmatpush1.msra.mxu0 0.0
  %166 = vmatprep.subr.mxu0 0.0
  %167 = vmatpush1.msra.mxu0 0.0
  %168 = vmatprep.subr.mxu0 0.0
  %169 = vmatpush1.msra.mxu0 0.0
  %170 = vmatprep.subr.mxu0 0.0
  %171 = vmatpush1.msra.mxu0 0.0
  %172 = vmatprep.subr.mxu0 0.0
  %173 = vmatpush1.msra.mxu0 0.0
  %174 = vmatprep.subr.mxu0 0.0
  %175 = vmatpush1.msra.mxu0 0.0
  %176 = vmatprep.subr.mxu0 0.0
  %177 = vmatpush1.msra.mxu0 0.0
  %178 = vmatprep.subr.mxu0 0.0
  %179 = vmatpush1.msra.mxu0 0.0
  %180 = vmatprep.subr.mxu0 0.0
  %181 = vmatpush1.msra.mxu0 0.0
  %182 = vmatprep.subr.mxu0 0.0
  %183 = vmatpush1.msra.mxu0 0.0
  %184 = vmatprep.subr.mxu0 0.0
  %185 = vmatpush1.msra.mxu0 0.0
  %186 = vmatprep.subr.mxu0 0.0
  %187 = vmatpush1.msra.mxu0 0.0
  %188 = vmatprep.subr.mxu0 0.0
  %189 = vmatpush1.msra.mxu0 0.0
  %190 = vmatprep.subr.mxu0 0.0
  %191 = vmatpush1.msra.mxu0 0.0
  %192 = vmatprep.mubr.f32.mxu0 0.0
  %193 = vmatmul.mubr.f32.gmra.mrb[0].mxu0 %v105
  %v194 = vpop.f32.mrb[0].mxu0
  %v195 = vadd.f32 0.0, %v194
  %v196 = vpop.f32.mrb[0].mxu0
  %197 = vmatprep.mubr.f32.mxu0 0.0
  %198 = vmatmul.mubr.f32.gmra.mrb[0].mxu0 %v108
  %v199 = vpop.f32.mrb[0].mxu0
  %v200 = vadd.f32 0.0, %v199
  %v201 = vpop.f32.mrb[0].mxu0
  %202 = vmatprep.mubr.f32.mxu0 0.0
  %203 = vmatmul.mubr.f32.gmra.mrb[0].mxu0 %v111
  %v204 = vpop.f32.mrb[0].mxu0
  %v205 = vadd.f32 0.0, %v204
  %v206 = vpop.f32.mrb[0].mxu0
  %207 = vmatprep.mubr.f32.mxu0 0.0
  %208 = vmatmul.mubr.f32.gmra.mrb[0].mxu0 %v114
  %v209 = vpop.f32.mrb[0].mxu0
  %v210 = vadd.f32 0.0, %v209
  %v211 = vpop.f32.mrb[0].mxu0
  %212 = vmatprep.mubr.f32.mxu0 0.0
  %213 = vmatmul.mubr.f32.gmra.mrb[0].mxu0 %v117
  %v214 = vpop.f32.mrb[0].mxu0
  %v215 = vadd.f32 0.0, %v214
  %v216 = vpop.f32.mrb[0].mxu0
  %217 = vmatprep.mubr.f32.mxu0 0.0
  %218 = vmatmul.mubr.f32.gmra.mrb[0].mxu0 %v120
  %v219 = vpop.f32.mrb[0].mxu0
  %v220 = vadd.f32 0.0, %v219
  %v221 = vpop.f32.mrb[0].mxu0
  %222 = vmatprep.mubr.f32.mxu0 0.0
  %223 = vmatmul.mubr.f32.gmra.mrb[0].mxu0 %v123
  %v224 = vpop.f32.mrb[0].mxu0
  %v225 = vadd.f32 0.0, %v224
  %v226 = vpop.f32.mrb[0].mxu0
  %227 = vmatprep.mubr.f32.mxu0 0.0
  %228 = vmatmul.mubr.f32.gmra.mrb[0].mxu0 %v126
  %v229 = vpop.f32.mrb[0].mxu0
  %v230 = vadd.f32 0.0, %v229
  %v231 = vpop.f32.mrb[0].mxu0
  %232 = vdwg.mxu0
  %v233 = vld [vmem:[%s2] sm:$0xff]
  %v234 = vld [vmem:[%s2 + $0x8] sm:$0xff]
  %v235 = vld [vmem:[%s2 + $0x10] sm:$0xff]
  %v236 = vld [vmem:[%s2 + $0x18] sm:$0xff]
  %v237 = vld [vmem:[%s5] sm:$0xff]
  %v238 = vld [vmem:[%s5 + $0x8] sm:$0xff]
  %v239 = vld [vmem:[%s5 + $0x10] sm:$0xff]
  %v240 = vld [vmem:[%s5 + $0x18] sm:$0xff]
  %v241 = vld [vmem:[%s3] sm:$0xff]
  %v242 = vld [vmem:[%s3 + $0x8] sm:$0xff]
  %v243 = vld [vmem:[%s3 + $0x10] sm:$0xff]
  %v244 = vld [vmem:[%s3 + $0x18] sm:$0xff]
  %v245 = vld [vmem:[%s6] sm:$0xff]
  %v246 = vld [vmem:[%s6 + $0x8] sm:$0xff]
  %v247 = vld [vmem:[%s6 + $0x10] sm:$0xff]
  %v248 = vld [vmem:[%s6 + $0x18] sm:$0xff]
  %v249 = vld [vmem:[%s4] sm:$0x1]
  %v250 = vld [vmem:[%s7] sm:$0x1]
  %v252 = vlaneseq
  %v253 = vshrl.u32 %v252, 7
  %v254 = vsub.s32 0, %v253
  %v255 = vrot.slane %v249, %v254
  %vm257 = vcmask 261120
  %v259 = vsel %vm257, %v195, 0
  %v262 = vsel %vm257, %v200, 0
  %v265 = vsel %vm257, %v205, 0
  %v268 = vsel %vm257, %v210, 0
  %v271 = vsel %vm257, %v215, 0
  %v274 = vsel %vm257, %v220, 0
  %v277 = vsel %vm257, %v225, 0
  %v280 = vsel %vm257, %v230, 0
  %282 = vmatprep.subr.mxu0 0.0
  %283 = vmatpush1.msra.mxu0 %v233
  %284 = vmatprep.subr.mxu0 0.0
  %285 = vmatpush1.msra.mxu0 %v234
  %286 = vmatprep.subr.mxu0 0.0
  %287 = vmatpush1.msra.mxu0 %v235
  %288 = vmatprep.subr.mxu0 0.0
  %289 = vmatpush1.msra.mxu0 %v236
  %290 = vmatprep.subr.mxu0 0.0
  %291 = vmatpush1.msra.mxu0 0.0
  %292 = vmatprep.subr.mxu0 0.0
  %293 = vmatpush1.msra.mxu0 0.0
  %294 = vmatprep.subr.mxu0 0.0
  %295 = vmatpush1.msra.mxu0 0.0
  %296 = vmatprep.subr.mxu0 0.0
  %297 = vmatpush1.msra.mxu0 0.0
  %298 = vmatprep.subr.mxu0 0.0
  %299 = vmatpush1.msra.mxu0 0.0
  %300 = vmatprep.subr.mxu0 0.0
  %301 = vmatpush1.msra.mxu0 0.0
  %302 = vmatprep.subr.mxu0 0.0
  %303 = vmatpush1.msra.mxu0 0.0
  %304 = vmatprep.subr.mxu0 0.0
  %305 = vmatpush1.msra.mxu0 0.0
  %306 = vmatprep.subr.mxu0 0.0
  %307 = vmatpush1.msra.mxu0 0.0
  %308 = vmatprep.subr.mxu0 0.0
  %309 = vmatpush1.msra.mxu0 0.0
  %310 = vmatprep.subr.mxu0 0.0
  %311 = vmatpush1.msra.mxu0 0.0
  %312 = vmatprep.subr.mxu0 0.0
  %313 = vmatpush1.msra.mxu0 0.0
  %314 = vmatprep.subr.mxu0 0.0
  %315 = vmatpush1.msra.mxu0 0.0
  %316 = vmatprep.subr.mxu0 0.0
  %317 = vmatpush1.msra.mxu0 0.0
  %318 = vmatprep.subr.mxu0 0.0
  %319 = vmatpush1.msra.mxu0 0.0
  %320 = vmatprep.subr.mxu0 0.0
  %321 = vmatpush1.msra.mxu0 0.0
  %322 = vmatprep.subr.mxu0 0.0
  %323 = vmatpush1.msra.mxu0 0.0
  %324 = vmatprep.subr.mxu0 0.0
  %325 = vmatpush1.msra.mxu0 0.0
  %326 = vmatprep.subr.mxu0 0.0
  %327 = vmatpush1.msra.mxu0 0.0
  %328 = vmatprep.subr.mxu0 0.0
  %329 = vmatpush1.msra.mxu0 0.0
  %330 = vmatprep.subr.mxu0 0.0
  %331 = vmatpush1.msra.mxu0 0.0
  %332 = vmatprep.subr.mxu0 0.0
  %333 = vmatpush1.msra.mxu0 0.0
  %334 = vmatprep.subr.mxu0 0.0
  %335 = vmatpush1.msra.mxu0 0.0
  %336 = vmatprep.subr.mxu0 0.0
  %337 = vmatpush1.msra.mxu0 0.0
  %338 = vmatprep.subr.mxu0 0.0
  %339 = vmatpush1.msra.mxu0 0.0
  %340 = vmatprep.subr.mxu0 0.0
  %341 = vmatpush1.msra.mxu0 0.0
  %342 = vmatprep.subr.mxu0 0.0
  %343 = vmatpush1.msra.mxu0 0.0
  %344 = vmatprep.subr.mxu0 0.0
  %345 = vmatpush1.msra.mxu0 0.0
  %346 = vmatprep.mubr.f32.mxu0 0.0
  %347 = vmatmul.mubr.f32.gmra.mrb[0].mxu0 %v259
  %v348 = vpop.f32.mrb[0].mxu0
  %v349 = vadd.f32 %v255, %v348
  %v350 = vpop.f32.mrb[0].mxu0
  %351 = vmatprep.mubr.f32.mxu0 0.0
  %352 = vmatmul.mubr.f32.gmra.mrb[0].mxu0 %v262
  %v353 = vpop.f32.mrb[0].mxu0
  %v354 = vadd.f32 %v255, %v353
  %v355 = vpop.f32.mrb[0].mxu0
  %356 = vmatprep.mubr.f32.mxu0 0.0
  %357 = vmatmul.mubr.f32.gmra.mrb[0].mxu0 %v265
  %v358 = vpop.f32.mrb[0].mxu0
  %v359 = vadd.f32 %v255, %v358
  %v360 = vpop.f32.mrb[0].mxu0
  %361 = vmatprep.mubr.f32.mxu0 0.0
  %362 = vmatmul.mubr.f32.gmra.mrb[0].mxu0 %v268
  %v363 = vpop.f32.mrb[0].mxu0
  %v364 = vadd.f32 %v255, %v363
  %v365 = vpop.f32.mrb[0].mxu0
  %366 = vmatprep.mubr.f32.mxu0 0.0
  %367 = vmatmul.mubr.f32.gmra.mrb[0].mxu0 %v271
  %v368 = vpop.f32.mrb[0].mxu0
  %v369 = vadd.f32 %v255, %v368
  %v370 = vpop.f32.mrb[0].mxu0
  %371 = vmatprep.mubr.f32.mxu0 0.0
  %372 = vmatmul.mubr.f32.gmra.mrb[0].mxu0 %v274
  %v373 = vpop.f32.mrb[0].mxu0
  %v374 = vadd.f32 %v255, %v373
  %v375 = vpop.f32.mrb[0].mxu0
  %376 = vmatprep.mubr.f32.mxu0 0.0
  %377 = vmatmul.mubr.f32.gmra.mrb[0].mxu0 %v277
  %v378 = vpop.f32.mrb[0].mxu0
  %v379 = vadd.f32 %v255, %v378
  %v380 = vpop.f32.mrb[0].mxu0
  %381 = vmatprep.mubr.f32.mxu0 0.0
  %382 = vmatmul.mubr.f32.gmra.mrb[0].mxu0 %v280
  %v383 = vpop.f32.mrb[0].mxu0
  %v384 = vadd.f32 %v255, %v383
  %v385 = vpop.f32.mrb[0].mxu0
  %386 = vdwg.mxu0
  %v388 = vsel %vm257, 0.0, 0
  %390 = vmatprep.subr.mxu0 0.0
  %391 = vmatpush1.msra.mxu0 %v241
  %392 = vmatprep.subr.mxu0 0.0
  %393 = vmatpush1.msra.mxu0 %v242
  %394 = vmatprep.subr.mxu0 0.0
  %395 = vmatpush1.msra.mxu0 %v243
  %396 = vmatprep.subr.mxu0 0.0
  %397 = vmatpush1.msra.mxu0 %v244
  %398 = vmatprep.subr.mxu0 0.0
  %399 = vmatpush1.msra.mxu0 0.0
  %400 = vmatprep.subr.mxu0 0.0
  %401 = vmatpush1.msra.mxu0 0.0
  %402 = vmatprep.subr.mxu0 0.0
  %403 = vmatpush1.msra.mxu0 0.0
  %404 = vmatprep.subr.mxu0 0.0
  %405 = vmatpush1.msra.mxu0 0.0
  %406 = vmatprep.subr.mxu0 0.0
  %407 = vmatpush1.msra.mxu0 0.0
  %408 = vmatprep.subr.mxu0 0.0
  %409 = vmatpush1.msra.mxu0 0.0
  %410 = vmatprep.subr.mxu0 0.0
  %411 = vmatpush1.msra.mxu0 0.0
  %412 = vmatprep.subr.mxu0 0.0
  %413 = vmatpush1.msra.mxu0 0.0
  %414 = vmatprep.subr.mxu0 0.0
  %415 = vmatpush1.msra.mxu0 0.0
  %416 = vmatprep.subr.mxu0 0.0
  %417 = vmatpush1.msra.mxu0 0.0
  %418 = vmatprep.subr.mxu0 0.0
  %419 = vmatpush1.msra.mxu0 0.0
  %420 = vmatprep.subr.mxu0 0.0
  %421 = vmatpush1.msra.mxu0 0.0
  %422 = vmatprep.subr.mxu0 0.0
  %423 = vmatpush1.msra.mxu0 0.0
  %424 = vmatprep.subr.mxu0 0.0
  %425 = vmatpush1.msra.mxu0 0.0
  %426 = vmatprep.subr.mxu0 0.0
  %427 = vmatpush1.msra.mxu0 0.0
  %428 = vmatprep.subr.mxu0 0.0
  %429 = vmatpush1.msra.mxu0 0.0
  %430 = vmatprep.subr.mxu0 0.0
  %431 = vmatpush1.msra.mxu0 0.0
  %432 = vmatprep.subr.mxu0 0.0
  %433 = vmatpush1.msra.mxu0 0.0
  %434 = vmatprep.subr.mxu0 0.0
  %435 = vmatpush1.msra.mxu0 0.0
  %436 = vmatprep.subr.mxu0 0.0
  %437 = vmatpush1.msra.mxu0 0.0
  %438 = vmatprep.subr.mxu0 0.0
  %439 = vmatpush1.msra.mxu0 0.0
  %440 = vmatprep.subr.mxu0 0.0
  %441 = vmatpush1.msra.mxu0 0.0
  %442 = vmatprep.subr.mxu0 0.0
  %443 = vmatpush1.msra.mxu0 0.0
  %444 = vmatprep.subr.mxu0 0.0
  %445 = vmatpush1.msra.mxu0 0.0
  %446 = vmatprep.subr.mxu0 0.0
  %447 = vmatpush1.msra.mxu0 0.0
  %448 = vmatprep.subr.mxu0 0.0
  %449 = vmatpush1.msra.mxu0 0.0
  %450 = vmatprep.subr.mxu0 0.0
  %451 = vmatpush1.msra.mxu0 0.0
  %452 = vmatprep.subr.mxu0 0.0
  %453 = vmatpush1.msra.mxu0 0.0
  %454 = vmatprep.mubr.f32.mxu0 0.0
  %455 = vmatmul.mubr.f32.gmra.mrb[0].mxu0 %v388
  %v456 = vpop.f32.mrb[0].mxu0
  %v457 = vadd.f32 0.0, %v456
  %v458 = vpop.f32.mrb[0].mxu0
  %459 = vdwg.mxu0
  %v460 = vadd.f32 %v349, %v457
  %v461 = vxor.u32 %v460, 2147483648
  %v462 = vmul.f32 %v461, 1.442695
  %v463 = vpow.pop %v462
  %v464 = vadd.f32 %v463, 1.0
  %v465 = vrcp.pop %v464
  %v466 = vmul.f32 1.0, %v465
  %v467 = vtanh.pop %v460
  %v468 = vmul.f32 %v466, 0.0
  %470 = vrot.lane.b32.xlu0 %v467, 32
  %v471 = vpop.permute.xlu0 %470
  %v473 = vmul.f32 %v466, %v471
  %475 = vrot.lane.b32.xlu0 %v473, 32
  %v476 = vpop.permute.xlu0 %475
  %v478 = vadd.f32 %v468, %v476
  %v479 = vtanh.pop %v478
  %481 = vrot.lane.b32.xlu0 %v479, 32
  %v482 = vpop.permute.xlu0 %481
  %v484 = vmul.f32 %v466, %v482
  %v486 = vlaneseq
  %v487 = vshrl.u32 %v486, 7
  %v488 = vsub.s32 0, %v487
  %v489 = vrot.slane %v250, %v488
  %492 = vrot.lane.b32.xlu0 %v484, 64
  %v493 = vpop.permute.xlu0 %492
  %v494 = vsel %vm257, %v493, 0
  %496 = vmatprep.subr.mxu0 0.0
  %497 = vmatpush1.msra.mxu0 %v237
  %498 = vmatprep.subr.mxu0 0.0
  %499 = vmatpush1.msra.mxu0 %v238
  %500 = vmatprep.subr.mxu0 0.0
  %501 = vmatpush1.msra.mxu0 %v239
  %502 = vmatprep.subr.mxu0 0.0
  %503 = vmatpush1.msra.mxu0 %v240
  %504 = vmatprep.subr.mxu0 0.0
  %505 = vmatpush1.msra.mxu0 0.0
  %506 = vmatprep.subr.mxu0 0.0
  %507 = vmatpush1.msra.mxu0 0.0
  %508 = vmatprep.subr.mxu0 0.0
  %509 = vmatpush1.msra.mxu0 0.0
  %510 = vmatprep.subr.mxu0 0.0
  %511 = vmatpush1.msra.mxu0 0.0
  %512 = vmatprep.subr.mxu0 0.0
  %513 = vmatpush1.msra.mxu0 0.0
  %514 = vmatprep.subr.mxu0 0.0
  %515 = vmatpush1.msra.mxu0 0.0
  %516 = vmatprep.subr.mxu0 0.0
  %517 = vmatpush1.msra.mxu0 0.0
  %518 = vmatprep.subr.mxu0 0.0
  %519 = vmatpush1.msra.mxu0 0.0
  %520 = vmatprep.subr.mxu0 0.0
  %521 = vmatpush1.msra.mxu0 0.0
  %522 = vmatprep.subr.mxu0 0.0
  %523 = vmatpush1.msra.mxu0 0.0
  %524 = vmatprep.subr.mxu0 0.0
  %525 = vmatpush1.msra.mxu0 0.0
  %526 = vmatprep.subr.mxu0 0.0
  %527 = vmatpush1.msra.mxu0 0.0
  %528 = vmatprep.subr.mxu0 0.0
  %529 = vmatpush1.msra.mxu0 0.0
  %530 = vmatprep.subr.mxu0 0.0
  %531 = vmatpush1.msra.mxu0 0.0
  %532 = vmatprep.subr.mxu0 0.0
  %533 = vmatpush1.msra.mxu0 0.0
  %534 = vmatprep.subr.mxu0 0.0
  %535 = vmatpush1.msra.mxu0 0.0
  %536 = vmatprep.subr.mxu0 0.0
  %537 = vmatpush1.msra.mxu0 0.0
  %538 = vmatprep.subr.mxu0 0.0
  %539 = vmatpush1.msra.mxu0 0.0
  %540 = vmatprep.subr.mxu0 0.0
  %541 = vmatpush1.msra.mxu0 0.0
  %542 = vmatprep.subr.mxu0 0.0
  %543 = vmatpush1.msra.mxu0 0.0
  %544 = vmatprep.subr.mxu0 0.0
  %545 = vmatpush1.msra.mxu0 0.0
  %546 = vmatprep.subr.mxu0 0.0
  %547 = vmatpush1.msra.mxu0 0.0
  %548 = vmatprep.subr.mxu0 0.0
  %549 = vmatpush1.msra.mxu0 0.0
  %550 = vmatprep.subr.mxu0 0.0
  %551 = vmatpush1.msra.mxu0 0.0
  %552 = vmatprep.subr.mxu0 0.0
  %553 = vmatpush1.msra.mxu0 0.0
  %554 = vmatprep.subr.mxu0 0.0
  %555 = vmatpush1.msra.mxu0 0.0
  %556 = vmatprep.subr.mxu0 0.0
  %557 = vmatpush1.msra.mxu0 0.0
  %558 = vmatprep.subr.mxu0 0.0
  %559 = vmatpush1.msra.mxu0 0.0
  %560 = vmatprep.mubr.f32.mxu0 0.0
  %561 = vmatmul.mubr.f32.gmra.mrb[0].mxu0 %v494
  %v562 = vpop.f32.mrb[0].mxu0
  %v563 = vadd.f32 %v489, %v562
  %v564 = vpop.f32.mrb[0].mxu0
  %565 = vdwg.mxu0
  %566 = vmatprep.subr.mxu0 0.0
  %567 = vmatpush1.msra.mxu0 %v245
  %568 = vmatprep.subr.mxu0 0.0
  %569 = vmatpush1.msra.mxu0 %v246
  %570 = vmatprep.subr.mxu0 0.0
  %571 = vmatpush1.msra.mxu0 %v247
  %572 = vmatprep.subr.mxu0 0.0
  %573 = vmatpush1.msra.mxu0 %v248
  %574 = vmatprep.subr.mxu0 0.0
  %575 = vmatpush1.msra.mxu0 0.0
  %576 = vmatprep.subr.mxu0 0.0
  %577 = vmatpush1.msra.mxu0 0.0
  %578 = vmatprep.subr.mxu0 0.0
  %579 = vmatpush1.msra.mxu0 0.0
  %580 = vmatprep.subr.mxu0 0.0
  %581 = vmatpush1.msra.mxu0 0.0
  %582 = vmatprep.subr.mxu0 0.0
  %583 = vmatpush1.msra.mxu0 0.0
  %584 = vmatprep.subr.mxu0 0.0
  %585 = vmatpush1.msra.mxu0 0.0
  %586 = vmatprep.subr.mxu0 0.0
  %587 = vmatpush1.msra.mxu0 0.0
  %588 = vmatprep.subr.mxu0 0.0
  %589 = vmatpush1.msra.mxu0 0.0
  %590 = vmatprep.subr.mxu0 0.0
  %591 = vmatpush1.msra.mxu0 0.0
  %592 = vmatprep.subr.mxu0 0.0
  %593 = vmatpush1.msra.mxu0 0.0
  %594 = vmatprep.subr.mxu0 0.0
  %595 = vmatpush1.msra.mxu0 0.0
  %596 = vmatprep.subr.mxu0 0.0
  %597 = vmatpush1.msra.mxu0 0.0
  %598 = vmatprep.subr.mxu0 0.0
  %599 = vmatpush1.msra.mxu0 0.0
  %600 = vmatprep.subr.mxu0 0.0
  %601 = vmatpush1.msra.mxu0 0.0
  %602 = vmatprep.subr.mxu0 0.0
  %603 = vmatpush1.msra.mxu0 0.0
  %604 = vmatprep.subr.mxu0 0.0
  %605 = vmatpush1.msra.mxu0 0.0
  %606 = vmatprep.subr.mxu0 0.0
  %607 = vmatpush1.msra.mxu0 0.0
  %608 = vmatprep.subr.mxu0 0.0
  %609 = vmatpush1.msra.mxu0 0.0
  %610 = vmatprep.subr.mxu0 0.0
  %611 = vmatpush1.msra.mxu0 0.0
  %612 = vmatprep.subr.mxu0 0.0
  %613 = vmatpush1.msra.mxu0 0.0
  %614 = vmatprep.subr.mxu0 0.0
  %615 = vmatpush1.msra.mxu0 0.0
  %616 = vmatprep.subr.mxu0 0.0
  %617 = vmatpush1.msra.mxu0 0.0
  %618 = vmatprep.subr.mxu0 0.0
  %619 = vmatpush1.msra.mxu0 0.0
  %620 = vmatprep.subr.mxu0 0.0
  %621 = vmatpush1.msra.mxu0 0.0
  %622 = vmatprep.subr.mxu0 0.0
  %623 = vmatpush1.msra.mxu0 0.0
  %624 = vmatprep.subr.mxu0 0.0
  %625 = vmatpush1.msra.mxu0 0.0
  %626 = vmatprep.subr.mxu0 0.0
  %627 = vmatpush1.msra.mxu0 0.0
  %628 = vmatprep.subr.mxu0 0.0
  %629 = vmatpush1.msra.mxu0 0.0
  %630 = vmatprep.mubr.f32.mxu0 0.0
  %631 = vmatmul.mubr.f32.gmra.mrb[0].mxu0 %v388
  %v632 = vpop.f32.mrb[0].mxu0
  %v633 = vadd.f32 0.0, %v632
  %v634 = vpop.f32.mrb[0].mxu0
  %635 = vdwg.mxu0
  %v636 = vadd.f32 %v563, %v633
  %v637 = vxor.u32 %v636, 2147483648
  %v638 = vmul.f32 %v637, 1.442695
  %v639 = vpow.pop %v638
  %v640 = vadd.f32 %v639, 1.0
  %v641 = vrcp.pop %v640
  %v642 = vmul.f32 1.0, %v641
  %v643 = vtanh.pop %v636
  %v644 = vmul.f32 %v642, 0.0
  %646 = vrot.lane.b32.xlu0 %v643, 32
  %v647 = vpop.permute.xlu0 %646
  %v649 = vmul.f32 %v642, %v647
  %651 = vrot.lane.b32.xlu0 %v649, 32
  %v652 = vpop.permute.xlu0 %651
  %v654 = vadd.f32 %v644, %v652
  %v655 = vtanh.pop %v654
  %657 = vrot.lane.b32.xlu0 %v655, 32
  %v658 = vpop.permute.xlu0 %657
  %v660 = vmul.f32 %v642, %v658
  %661 = vmatprep.subr.mxu0 0.0
  %662 = vmatpush1.msra.mxu0 %v241
  %663 = vmatprep.subr.mxu0 0.0
  %664 = vmatpush1.msra.mxu0 %v242
  %665 = vmatprep.subr.mxu0 0.0
  %666 = vmatpush1.msra.mxu0 %v243
  %667 = vmatprep.subr.mxu0 0.0
  %668 = vmatpush1.msra.mxu0 %v244
  %669 = vmatprep.subr.mxu0 0.0
  %670 = vmatpush1.msra.mxu0 0.0
  %671 = vmatprep.subr.mxu0 0.0
  %672 = vmatpush1.msra.mxu0 0.0
  %673 = vmatprep.subr.mxu0 0.0
  %674 = vmatpush1.msra.mxu0 0.0
  %675 = vmatprep.subr.mxu0 0.0
  %676 = vmatpush1.msra.mxu0 0.0
  %677 = vmatprep.subr.mxu0 0.0
  %678 = vmatpush1.msra.mxu0 0.0
  %679 = vmatprep.subr.mxu0 0.0
  %680 = vmatpush1.msra.mxu0 0.0
  %681 = vmatprep.subr.mxu0 0.0
  %682 = vmatpush1.msra.mxu0 0.0
  %683 = vmatprep.subr.mxu0 0.0
  %684 = vmatpush1.msra.mxu0 0.0
  %685 = vmatprep.subr.mxu0 0.0
  %686 = vmatpush1.msra.mxu0 0.0
  %687 = vmatprep.subr.mxu0 0.0
  %688 = vmatpush1.msra.mxu0 0.0
  %689 = vmatprep.subr.mxu0 0.0
  %690 = vmatpush1.msra.mxu0 0.0
  %691 = vmatprep.subr.mxu0 0.0
  %692 = vmatpush1.msra.mxu0 0.0
  %693 = vmatprep.subr.mxu0 0.0
  %694 = vmatpush1.msra.mxu0 0.0
  %695 = vmatprep.subr.mxu0 0.0
  %696 = vmatpush1.msra.mxu0 0.0
  %697 = vmatprep.subr.mxu0 0.0
  %698 = vmatpush1.msra.mxu0 0.0
  %699 = vmatprep.subr.mxu0 0.0
  %700 = vmatpush1.msra.mxu0 0.0
  %701 = vmatprep.subr.mxu0 0.0
  %702 = vmatpush1.msra.mxu0 0.0
  %703 = vmatprep.subr.mxu0 0.0
  %704 = vmatpush1.msra.mxu0 0.0
  %705 = vmatprep.subr.mxu0 0.0
  %706 = vmatpush1.msra.mxu0 0.0
  %707 = vmatprep.subr.mxu0 0.0
  %708 = vmatpush1.msra.mxu0 0.0
  %709 = vmatprep.subr.mxu0 0.0
  %710 = vmatpush1.msra.mxu0 0.0
  %711 = vmatprep.subr.mxu0 0.0
  %712 = vmatpush1.msra.mxu0 0.0
  %713 = vmatprep.subr.mxu0 0.0
  %714 = vmatpush1.msra.mxu0 0.0
  %715 = vmatprep.subr.mxu0 0.0
  %716 = vmatpush1.msra.mxu0 0.0
  %717 = vmatprep.subr.mxu0 0.0
  %718 = vmatpush1.msra.mxu0 0.0
  %719 = vmatprep.subr.mxu0 0.0
  %720 = vmatpush1.msra.mxu0 0.0
  %721 = vmatprep.subr.mxu0 0.0
  %722 = vmatpush1.msra.mxu0 0.0
  %723 = vmatprep.subr.mxu0 0.0
  %724 = vmatpush1.msra.mxu0 0.0
  %725 = vmatprep.mubr.f32.mxu0 0.0
  %726 = vmatmul.mubr.f32.gmra.mrb[0].mxu0 %v494
  %v727 = vpop.f32.mrb[0].mxu0
  %v728 = vadd.f32 0.0, %v727
  %v729 = vpop.f32.mrb[0].mxu0
  %730 = vdwg.mxu0
  %v731 = vadd.f32 %v354, %v728
  %v732 = vxor.u32 %v731, 2147483648
  %v733 = vmul.f32 %v732, 1.442695
  %v734 = vpow.pop %v733
  %v735 = vadd.f32 %v734, 1.0
  %v736 = vrcp.pop %v735
  %v737 = vmul.f32 1.0, %v736
  %v738 = vtanh.pop %v731
  %v739 = vmul.f32 %v737, %v478
  %741 = vrot.lane.b32.xlu0 %v738, 32
  %v742 = vpop.permute.xlu0 %741
  %v744 = vmul.f32 %v737, %v742
  %746 = vrot.lane.b32.xlu0 %v744, 32
  %v747 = vpop.permute.xlu0 %746
  %v749 = vadd.f32 %v739, %v747
  %v750 = vtanh.pop %v749
  %752 = vrot.lane.b32.xlu0 %v750, 32
  %v753 = vpop.permute.xlu0 %752
  %v755 = vmul.f32 %v737, %v753
  %757 = vrot.lane.b32.xlu0 %v755, 64
  %v758 = vpop.permute.xlu0 %757
  %v759 = vsel %vm257, %v758, 0
  %761 = vmatprep.subr.mxu0 0.0
  %762 = vmatpush1.msra.mxu0 %v237
  %763 = vmatprep.subr.mxu0 0.0
  %764 = vmatpush1.msra.mxu0 %v238
  %765 = vmatprep.subr.mxu0 0.0
  %766 = vmatpush1.msra.mxu0 %v239
  %767 = vmatprep.subr.mxu0 0.0
  %768 = vmatpush1.msra.mxu0 %v240
  %769 = vmatprep.subr.mxu0 0.0
  %770 = vmatpush1.msra.mxu0 0.0
  %771 = vmatprep.subr.mxu0 0.0
  %772 = vmatpush1.msra.mxu0 0.0
  %773 = vmatprep.subr.mxu0 0.0
  %774 = vmatpush1.msra.mxu0 0.0
  %775 = vmatprep.subr.mxu0 0.0
  %776 = vmatpush1.msra.mxu0 0.0
  %777 = vmatprep.subr.mxu0 0.0
  %778 = vmatpush1.msra.mxu0 0.0
  %779 = vmatprep.subr.mxu0 0.0
  %780 = vmatpush1.msra.mxu0 0.0
  %781 = vmatprep.subr.mxu0 0.0
  %782 = vmatpush1.msra.mxu0 0.0
  %783 = vmatprep.subr.mxu0 0.0
  %784 = vmatpush1.msra.mxu0 0.0
  %785 = vmatprep.subr.mxu0 0.0
  %786 = vmatpush1.msra.mxu0 0.0
  %787 = vmatprep.subr.mxu0 0.0
  %788 = vmatpush1.msra.mxu0 0.0
  %789 = vmatprep.subr.mxu0 0.0
  %790 = vmatpush1.msra.mxu0 0.0
  %791 = vmatprep.subr.mxu0 0.0
  %792 = vmatpush1.msra.mxu0 0.0
  %793 = vmatprep.subr.mxu0 0.0
  %794 = vmatpush1.msra.mxu0 0.0
  %795 = vmatprep.subr.mxu0 0.0
  %796 = vmatpush1.msra.mxu0 0.0
  %797 = vmatprep.subr.mxu0 0.0
  %798 = vmatpush1.msra.mxu0 0.0
  %799 = vmatprep.subr.mxu0 0.0
  %800 = vmatpush1.msra.mxu0 0.0
  %801 = vmatprep.subr.mxu0 0.0
  %802 = vmatpush1.msra.mxu0 0.0
  %803 = vmatprep.subr.mxu0 0.0
  %804 = vmatpush1.msra.mxu0 0.0
  %805 = vmatprep.subr.mxu0 0.0
  %806 = vmatpush1.msra.mxu0 0.0
  %807 = vmatprep.subr.mxu0 0.0
  %808 = vmatpush1.msra.mxu0 0.0
  %809 = vmatprep.subr.mxu0 0.0
  %810 = vmatpush1.msra.mxu0 0.0
  %811 = vmatprep.subr.mxu0 0.0
  %812 = vmatpush1.msra.mxu0 0.0
  %813 = vmatprep.subr.mxu0 0.0
  %814 = vmatpush1.msra.mxu0 0.0
  %815 = vmatprep.subr.mxu0 0.0
  %816 = vmatpush1.msra.mxu0 0.0
  %817 = vmatprep.subr.mxu0 0.0
  %818 = vmatpush1.msra.mxu0 0.0
  %819 = vmatprep.subr.mxu0 0.0
  %820 = vmatpush1.msra.mxu0 0.0
  %821 = vmatprep.subr.mxu0 0.0
  %822 = vmatpush1.msra.mxu0 0.0
  %823 = vmatprep.subr.mxu0 0.0
  %824 = vmatpush1.msra.mxu0 0.0
  %825 = vmatprep.mubr.f32.mxu0 0.0
  %826 = vmatmul.mubr.f32.gmra.mrb[0].mxu0 %v759
  %v827 = vpop.f32.mrb[0].mxu0
  %v828 = vadd.f32 %v489, %v827
  %v829 = vpop.f32.mrb[0].mxu0
  %830 = vdwg.mxu0
  %832 = vrot.lane.b32.xlu0 %v660, 64
  %v833 = vpop.permute.xlu0 %832
  %v834 = vsel %vm257, %v833, 0
  %836 = vmatprep.subr.mxu0 0.0
  %837 = vmatpush1.msra.mxu0 %v245
  %838 = vmatprep.subr.mxu0 0.0
  %839 = vmatpush1.msra.mxu0 %v246
  %840 = vmatprep.subr.mxu0 0.0
  %841 = vmatpush1.msra.mxu0 %v247
  %842 = vmatprep.subr.mxu0 0.0
  %843 = vmatpush1.msra.mxu0 %v248
  %844 = vmatprep.subr.mxu0 0.0
  %845 = vmatpush1.msra.mxu0 0.0
  %846 = vmatprep.subr.mxu0 0.0
  %847 = vmatpush1.msra.mxu0 0.0
  %848 = vmatprep.subr.mxu0 0.0
  %849 = vmatpush1.msra.mxu0 0.0
  %850 = vmatprep.subr.mxu0 0.0
  %851 = vmatpush1.msra.mxu0 0.0
  %852 = vmatprep.subr.mxu0 0.0
  %853 = vmatpush1.msra.mxu0 0.0
  %854 = vmatprep.subr.mxu0 0.0
  %855 = vmatpush1.msra.mxu0 0.0
  %856 = vmatprep.subr.mxu0 0.0
  %857 = vmatpush1.msra.mxu0 0.0
  %858 = vmatprep.subr.mxu0 0.0
  %859 = vmatpush1.msra.mxu0 0.0
  %860 = vmatprep.subr.mxu0 0.0
  %861 = vmatpush1.msra.mxu0 0.0
  %862 = vmatprep.subr.mxu0 0.0
  %863 = vmatpush1.msra.mxu0 0.0
  %864 = vmatprep.subr.mxu0 0.0
  %865 = vmatpush1.msra.mxu0 0.0
  %866 = vmatprep.subr.mxu0 0.0
  %867 = vmatpush1.msra.mxu0 0.0
  %868 = vmatprep.subr.mxu0 0.0
  %869 = vmatpush1.msra.mxu0 0.0
  %870 = vmatprep.subr.mxu0 0.0
  %871 = vmatpush1.msra.mxu0 0.0
  %872 = vmatprep.subr.mxu0 0.0
  %873 = vmatpush1.msra.mxu0 0.0
  %874 = vmatprep.subr.mxu0 0.0
  %875 = vmatpush1.msra.mxu0 0.0
  %876 = vmatprep.subr.mxu0 0.0
  %877 = vmatpush1.msra.mxu0 0.0
  %878 = vmatprep.subr.mxu0 0.0
  %879 = vmatpush1.msra.mxu0 0.0
  %880 = vmatprep.subr.mxu0 0.0
  %881 = vmatpush1.msra.mxu0 0.0
  %882 = vmatprep.subr.mxu0 0.0
  %883 = vmatpush1.msra.mxu0 0.0
  %884 = vmatprep.subr.mxu0 0.0
  %885 = vmatpush1.msra.mxu0 0.0
  %886 = vmatprep.subr.mxu0 0.0
  %887 = vmatpush1.msra.mxu0 0.0
  %888 = vmatprep.subr.mxu0 0.0
  %889 = vmatpush1.msra.mxu0 0.0
  %890 = vmatprep.subr.mxu0 0.0
  %891 = vmatpush1.msra.mxu0 0.0
  %892 = vmatprep.subr.mxu0 0.0
  %893 = vmatpush1.msra.mxu0 0.0
  %894 = vmatprep.subr.mxu0 0.0
  %895 = vmatpush1.msra.mxu0 0.0
  %896 = vmatprep.subr.mxu0 0.0
  %897 = vmatpush1.msra.mxu0 0.0
  %898 = vmatprep.subr.mxu0 0.0
  %899 = vmatpush1.msra.mxu0 0.0
  %900 = vmatprep.mubr.f32.mxu0 0.0
  %901 = vmatmul.mubr.f32.gmra.mrb[0].mxu0 %v834
  %v902 = vpop.f32.mrb[0].mxu0
  %v903 = vadd.f32 0.0, %v902
  %v904 = vpop.f32.mrb[0].mxu0
  %905 = vdwg.mxu0
  %v906 = vadd.f32 %v828, %v903
  %v907 = vxor.u32 %v906, 2147483648
  %v908 = vmul.f32 %v907, 1.442695
  %v909 = vpow.pop %v908
  %v910 = vadd.f32 %v909, 1.0
  %v911 = vrcp.pop %v910
  %v912 = vmul.f32 1.0, %v911
  %v913 = vtanh.pop %v906
  %v914 = vmul.f32 %v912, %v654
  %916 = vrot.lane.b32.xlu0 %v913, 32
  %v917 = vpop.permute.xlu0 %916
  %v919 = vmul.f32 %v912, %v917
  %921 = vrot.lane.b32.xlu0 %v919, 32
  %v922 = vpop.permute.xlu0 %921
  %v924 = vadd.f32 %v914, %v922
  %v925 = vtanh.pop %v924
  %927 = vrot.lane.b32.xlu0 %v925, 32
  %v928 = vpop.permute.xlu0 %927
  %v930 = vmul.f32 %v912, %v928
  %931 = vmatprep.subr.mxu0 0.0
  %932 = vmatpush1.msra.mxu0 %v241
  %933 = vmatprep.subr.mxu0 0.0
  %934 = vmatpush1.msra.mxu0 %v242
  %935 = vmatprep.subr.mxu0 0.0
  %936 = vmatpush1.msra.mxu0 %v243
  %937 = vmatprep.subr.mxu0 0.0
  %938 = vmatpush1.msra.mxu0 %v244
  %939 = vmatprep.subr.mxu0 0.0
  %940 = vmatpush1.msra.mxu0 0.0
  %941 = vmatprep.subr.mxu0 0.0
  %942 = vmatpush1.msra.mxu0 0.0
  %943 = vmatprep.subr.mxu0 0.0
  %944 = vmatpush1.msra.mxu0 0.0
  %945 = vmatprep.subr.mxu0 0.0
  %946 = vmatpush1.msra.mxu0 0.0
  %947 = vmatprep.subr.mxu0 0.0
  %948 = vmatpush1.msra.mxu0 0.0
  %949 = vmatprep.subr.mxu0 0.0
  %950 = vmatpush1.msra.mxu0 0.0
  %951 = vmatprep.subr.mxu0 0.0
  %952 = vmatpush1.msra.mxu0 0.0
  %953 = vmatprep.subr.mxu0 0.0
  %954 = vmatpush1.msra.mxu0 0.0
  %955 = vmatprep.subr.mxu0 0.0
  %956 = vmatpush1.msra.mxu0 0.0
  %957 = vmatprep.subr.mxu0 0.0
  %958 = vmatpush1.msra.mxu0 0.0
  %959 = vmatprep.subr.mxu0 0.0
  %960 = vmatpush1.msra.mxu0 0.0
  %961 = vmatprep.subr.mxu0 0.0
  %962 = vmatpush1.msra.mxu0 0.0
  %963 = vmatprep.subr.mxu0 0.0
  %964 = vmatpush1.msra.mxu0 0.0
  %965 = vmatprep.subr.mxu0 0.0
  %966 = vmatpush1.msra.mxu0 0.0
  %967 = vmatprep.subr.mxu0 0.0
  %968 = vmatpush1.msra.mxu0 0.0
  %969 = vmatprep.subr.mxu0 0.0
  %970 = vmatpush1.msra.mxu0 0.0
  %971 = vmatprep.subr.mxu0 0.0
  %972 = vmatpush1.msra.mxu0 0.0
  %973 = vmatprep.subr.mxu0 0.0
  %974 = vmatpush1.msra.mxu0 0.0
  %975 = vmatprep.subr.mxu0 0.0
  %976 = vmatpush1.msra.mxu0 0.0
  %977 = vmatprep.subr.mxu0 0.0
  %978 = vmatpush1.msra.mxu0 0.0
  %979 = vmatprep.subr.mxu0 0.0
  %980 = vmatpush1.msra.mxu0 0.0
  %981 = vmatprep.subr.mxu0 0.0
  %982 = vmatpush1.msra.mxu0 0.0
  %983 = vmatprep.subr.mxu0 0.0
  %984 = vmatpush1.msra.mxu0 0.0
  %985 = vmatprep.subr.mxu0 0.0
  %986 = vmatpush1.msra.mxu0 0.0
  %987 = vmatprep.subr.mxu0 0.0
  %988 = vmatpush1.msra.mxu0 0.0
  %989 = vmatprep.subr.mxu0 0.0
  %990 = vmatpush1.msra.mxu0 0.0
  %991 = vmatprep.subr.mxu0 0.0
  %992 = vmatpush1.msra.mxu0 0.0
  %993 = vmatprep.subr.mxu0 0.0
  %994 = vmatpush1.msra.mxu0 0.0
  %995 = vmatprep.mubr.f32.mxu0 0.0
  %996 = vmatmul.mubr.f32.gmra.mrb[0].mxu0 %v759
  %v997 = vpop.f32.mrb[0].mxu0
  %v998 = vadd.f32 0.0, %v997
  %v999 = vpop.f32.mrb[0].mxu0
  %1000 = vdwg.mxu0
  %v1001 = vadd.f32 %v359, %v998
  %v1002 = vxor.u32 %v1001, 2147483648
  %v1003 = vmul.f32 %v1002, 1.442695
  %v1004 = vpow.pop %v1003
  %v1005 = vadd.f32 %v1004, 1.0
  %v1006 = vrcp.pop %v1005
  %v1007 = vmul.f32 1.0, %v1006
  %v1008 = vtanh.pop %v1001
  %v1009 = vmul.f32 %v1007, %v749
  %1011 = vrot.lane.b32.xlu0 %v1008, 32
  %v1012 = vpop.permute.xlu0 %1011
  %v1014 = vmul.f32 %v1007, %v1012
  %1016 = vrot.lane.b32.xlu0 %v1014, 32
  %v1017 = vpop.permute.xlu0 %1016
  %v1019 = vadd.f32 %v1009, %v1017
  %v1020 = vtanh.pop %v1019
  %1022 = vrot.lane.b32.xlu0 %v1020, 32
  %v1023 = vpop.permute.xlu0 %1022
  %v1025 = vmul.f32 %v1007, %v1023
  %1027 = vrot.lane.b32.xlu0 %v1025, 64
  %v1028 = vpop.permute.xlu0 %1027
  %v1029 = vsel %vm257, %v1028, 0
  %1031 = vmatprep.subr.mxu0 0.0
  %1032 = vmatpush1.msra.mxu0 %v237
  %1033 = vmatprep.subr.mxu0 0.0
  %1034 = vmatpush1.msra.mxu0 %v238
  %1035 = vmatprep.subr.mxu0 0.0
  %1036 = vmatpush1.msra.mxu0 %v239
  %1037 = vmatprep.subr.mxu0 0.0
  %1038 = vmatpush1.msra.mxu0 %v240
  %1039 = vmatprep.subr.mxu0 0.0
  %1040 = vmatpush1.msra.mxu0 0.0
  %1041 = vmatprep.subr.mxu0 0.0
  %1042 = vmatpush1.msra.mxu0 0.0
  %1043 = vmatprep.subr.mxu0 0.0
  %1044 = vmatpush1.msra.mxu0 0.0
  %1045 = vmatprep.subr.mxu0 0.0
  %1046 = vmatpush1.msra.mxu0 0.0
  %1047 = vmatprep.subr.mxu0 0.0
  %1048 = vmatpush1.msra.mxu0 0.0
  %1049 = vmatprep.subr.mxu0 0.0
  %1050 = vmatpush1.msra.mxu0 0.0
  %1051 = vmatprep.subr.mxu0 0.0
  %1052 = vmatpush1.msra.mxu0 0.0
  %1053 = vmatprep.subr.mxu0 0.0
  %1054 = vmatpush1.msra.mxu0 0.0
  %1055 = vmatprep.subr.mxu0 0.0
  %1056 = vmatpush1.msra.mxu0 0.0
  %1057 = vmatprep.subr.mxu0 0.0
  %1058 = vmatpush1.msra.mxu0 0.0
  %1059 = vmatprep.subr.mxu0 0.0
  %1060 = vmatpush1.msra.mxu0 0.0
  %1061 = vmatprep.subr.mxu0 0.0
  %1062 = vmatpush1.msra.mxu0 0.0
  %1063 = vmatprep.subr.mxu0 0.0
  %1064 = vmatpush1.msra.mxu0 0.0
  %1065 = vmatprep.subr.mxu0 0.0
  %1066 = vmatpush1.msra.mxu0 0.0
  %1067 = vmatprep.subr.mxu0 0.0
  %1068 = vmatpush1.msra.mxu0 0.0
  %1069 = vmatprep.subr.mxu0 0.0
  %1070 = vmatpush1.msra.mxu0 0.0
  %1071 = vmatprep.subr.mxu0 0.0
  %1072 = vmatpush1.msra.mxu0 0.0
  %1073 = vmatprep.subr.mxu0 0.0
  %1074 = vmatpush1.msra.mxu0 0.0
  %1075 = vmatprep.subr.mxu0 0.0
  %1076 = vmatpush1.msra.mxu0 0.0
  %1077 = vmatprep.subr.mxu0 0.0
  %1078 = vmatpush1.msra.mxu0 0.0
  %1079 = vmatprep.subr.mxu0 0.0
  %1080 = vmatpush1.msra.mxu0 0.0
  %1081 = vmatprep.subr.mxu0 0.0
  %1082 = vmatpush1.msra.mxu0 0.0
  %1083 = vmatprep.subr.mxu0 0.0
  %1084 = vmatpush1.msra.mxu0 0.0
  %1085 = vmatprep.subr.mxu0 0.0
  %1086 = vmatpush1.msra.mxu0 0.0
  %1087 = vmatprep.subr.mxu0 0.0
  %1088 = vmatpush1.msra.mxu0 0.0
  %1089 = vmatprep.subr.mxu0 0.0
  %1090 = vmatpush1.msra.mxu0 0.0
  %1091 = vmatprep.subr.mxu0 0.0
  %1092 = vmatpush1.msra.mxu0 0.0
  %1093 = vmatprep.subr.mxu0 0.0
  %1094 = vmatpush1.msra.mxu0 0.0
  %1095 = vmatprep.mubr.f32.mxu0 0.0
  %1096 = vmatmul.mubr.f32.gmra.mrb[0].mxu0 %v1029
  %v1097 = vpop.f32.mrb[0].mxu0
  %v1098 = vadd.f32 %v489, %v1097
  %v1099 = vpop.f32.mrb[0].mxu0
  %1100 = vdwg.mxu0
  %1102 = vrot.lane.b32.xlu0 %v930, 64
  %v1103 = vpop.permute.xlu0 %1102
  %v1104 = vsel %vm257, %v1103, 0
  %1106 = vmatprep.subr.mxu0 0.0
  %1107 = vmatpush1.msra.mxu0 %v245
  %1108 = vmatprep.subr.mxu0 0.0
  %1109 = vmatpush1.msra.mxu0 %v246
  %1110 = vmatprep.subr.mxu0 0.0
  %1111 = vmatpush1.msra.mxu0 %v247
  %1112 = vmatprep.subr.mxu0 0.0
  %1113 = vmatpush1.msra.mxu0 %v248
  %1114 = vmatprep.subr.mxu0 0.0
  %1115 = vmatpush1.msra.mxu0 0.0
  %1116 = vmatprep.subr.mxu0 0.0
  %1117 = vmatpush1.msra.mxu0 0.0
  %1118 = vmatprep.subr.mxu0 0.0
  %1119 = vmatpush1.msra.mxu0 0.0
  %1120 = vmatprep.subr.mxu0 0.0
  %1121 = vmatpush1.msra.mxu0 0.0
  %1122 = vmatprep.subr.mxu0 0.0
  %1123 = vmatpush1.msra.mxu0 0.0
  %1124 = vmatprep.subr.mxu0 0.0
  %1125 = vmatpush1.msra.mxu0 0.0
  %1126 = vmatprep.subr.mxu0 0.0
  %1127 = vmatpush1.msra.mxu0 0.0
  %1128 = vmatprep.subr.mxu0 0.0
  %1129 = vmatpush1.msra.mxu0 0.0
  %1130 = vmatprep.subr.mxu0 0.0
  %1131 = vmatpush1.msra.mxu0 0.0
  %1132 = vmatprep.subr.mxu0 0.0
  %1133 = vmatpush1.msra.mxu0 0.0
  %1134 = vmatprep.subr.mxu0 0.0
  %1135 = vmatpush1.msra.mxu0 0.0
  %1136 = vmatprep.subr.mxu0 0.0
  %1137 = vmatpush1.msra.mxu0 0.0
  %1138 = vmatprep.subr.mxu0 0.0
  %1139 = vmatpush1.msra.mxu0 0.0
  %1140 = vmatprep.subr.mxu0 0.0
  %1141 = vmatpush1.msra.mxu0 0.0
  %1142 = vmatprep.subr.mxu0 0.0
  %1143 = vmatpush1.msra.mxu0 0.0
  %1144 = vmatprep.subr.mxu0 0.0
  %1145 = vmatpush1.msra.mxu0 0.0
  %1146 = vmatprep.subr.mxu0 0.0
  %1147 = vmatpush1.msra.mxu0 0.0
  %1148 = vmatprep.subr.mxu0 0.0
  %1149 = vmatpush1.msra.mxu0 0.0
  %1150 = vmatprep.subr.mxu0 0.0
  %1151 = vmatpush1.msra.mxu0 0.0
  %1152 = vmatprep.subr.mxu0 0.0
  %1153 = vmatpush1.msra.mxu0 0.0
  %1154 = vmatprep.subr.mxu0 0.0
  %1155 = vmatpush1.msra.mxu0 0.0
  %1156 = vmatprep.subr.mxu0 0.0
  %1157 = vmatpush1.msra.mxu0 0.0
  %1158 = vmatprep.subr.mxu0 0.0
  %1159 = vmatpush1.msra.mxu0 0.0
  %1160 = vmatprep.subr.mxu0 0.0
  %1161 = vmatpush1.msra.mxu0 0.0
  %1162 = vmatprep.subr.mxu0 0.0
  %1163 = vmatpush1.msra.mxu0 0.0
  %1164 = vmatprep.subr.mxu0 0.0
  %1165 = vmatpush1.msra.mxu0 0.0
  %1166 = vmatprep.subr.mxu0 0.0
  %1167 = vmatpush1.msra.mxu0 0.0
  %1168 = vmatprep.subr.mxu0 0.0
  %1169 = vmatpush1.msra.mxu0 0.0
  %1170 = vmatprep.mubr.f32.mxu0 0.0
  %1171 = vmatmul.mubr.f32.gmra.mrb[0].mxu0 %v1104
  %v1172 = vpop.f32.mrb[0].mxu0
  %v1173 = vadd.f32 0.0, %v1172
  %v1174 = vpop.f32.mrb[0].mxu0
  %1175 = vdwg.mxu0
  %v1176 = vadd.f32 %v1098, %v1173
  %v1177 = vxor.u32 %v1176, 2147483648
  %v1178 = vmul.f32 %v1177, 1.442695
  %v1179 = vpow.pop %v1178
  %v1180 = vadd.f32 %v1179, 1.0
  %v1181 = vrcp.pop %v1180
  %v1182 = vmul.f32 1.0, %v1181
  %v1183 = vtanh.pop %v1176
  %v1184 = vmul.f32 %v1182, %v924
  %1186 = vrot.lane.b32.xlu0 %v1183, 32
  %v1187 = vpop.permute.xlu0 %1186
  %v1189 = vmul.f32 %v1182, %v1187
  %1191 = vrot.lane.b32.xlu0 %v1189, 32
  %v1192 = vpop.permute.xlu0 %1191
  %v1194 = vadd.f32 %v1184, %v1192
  %v1195 = vtanh.pop %v1194
  %1197 = vrot.lane.b32.xlu0 %v1195, 32
  %v1198 = vpop.permute.xlu0 %1197
  %v1200 = vmul.f32 %v1182, %v1198
  %1201 = vmatprep.subr.mxu0 0.0
  %1202 = vmatpush1.msra.mxu0 %v241
  %1203 = vmatprep.subr.mxu0 0.0
  %1204 = vmatpush1.msra.mxu0 %v242
  %1205 = vmatprep.subr.mxu0 0.0
  %1206 = vmatpush1.msra.mxu0 %v243
  %1207 = vmatprep.subr.mxu0 0.0
  %1208 = vmatpush1.msra.mxu0 %v244
  %1209 = vmatprep.subr.mxu0 0.0
  %1210 = vmatpush1.msra.mxu0 0.0
  %1211 = vmatprep.subr.mxu0 0.0
  %1212 = vmatpush1.msra.mxu0 0.0
  %1213 = vmatprep.subr.mxu0 0.0
  %1214 = vmatpush1.msra.mxu0 0.0
  %1215 = vmatprep.subr.mxu0 0.0
  %1216 = vmatpush1.msra.mxu0 0.0
  %1217 = vmatprep.subr.mxu0 0.0
  %1218 = vmatpush1.msra.mxu0 0.0
  %1219 = vmatprep.subr.mxu0 0.0
  %1220 = vmatpush1.msra.mxu0 0.0
  %1221 = vmatprep.subr.mxu0 0.0
  %1222 = vmatpush1.msra.mxu0 0.0
  %1223 = vmatprep.subr.mxu0 0.0
  %1224 = vmatpush1.msra.mxu0 0.0
  %1225 = vmatprep.subr.mxu0 0.0
  %1226 = vmatpush1.msra.mxu0 0.0
  %1227 = vmatprep.subr.mxu0 0.0
  %1228 = vmatpush1.msra.mxu0 0.0
  %1229 = vmatprep.subr.mxu0 0.0
  %1230 = vmatpush1.msra.mxu0 0.0
  %1231 = vmatprep.subr.mxu0 0.0
  %1232 = vmatpush1.msra.mxu0 0.0
  %1233 = vmatprep.subr.mxu0 0.0
  %1234 = vmatpush1.msra.mxu0 0.0
  %1235 = vmatprep.subr.mxu0 0.0
  %1236 = vmatpush1.msra.mxu0 0.0
  %1237 = vmatprep.subr.mxu0 0.0
  %1238 = vmatpush1.msra.mxu0 0.0
  %1239 = vmatprep.subr.mxu0 0.0
  %1240 = vmatpush1.msra.mxu0 0.0
  %1241 = vmatprep.subr.mxu0 0.0
  %1242 = vmatpush1.msra.mxu0 0.0
  %1243 = vmatprep.subr.mxu0 0.0
  %1244 = vmatpush1.msra.mxu0 0.0
  %1245 = vmatprep.subr.mxu0 0.0
  %1246 = vmatpush1.msra.mxu0 0.0
  %1247 = vmatprep.subr.mxu0 0.0
  %1248 = vmatpush1.msra.mxu0 0.0
  %1249 = vmatprep.subr.mxu0 0.0
  %1250 = vmatpush1.msra.mxu0 0.0
  %1251 = vmatprep.subr.mxu0 0.0
  %1252 = vmatpush1.msra.mxu0 0.0
  %1253 = vmatprep.subr.mxu0 0.0
  %1254 = vmatpush1.msra.mxu0 0.0
  %1255 = vmatprep.subr.mxu0 0.0
  %1256 = vmatpush1.msra.mxu0 0.0
  %1257 = vmatprep.subr.mxu0 0.0
  %1258 = vmatpush1.msra.mxu0 0.0
  %1259 = vmatprep.subr.mxu0 0.0
  %1260 = vmatpush1.msra.mxu0 0.0
  %1261 = vmatprep.subr.mxu0 0.0
  %1262 = vmatpush1.msra.mxu0 0.0
  %1263 = vmatprep.subr.mxu0 0.0
  %1264 = vmatpush1.msra.mxu0 0.0
  %1265 = vmatprep.mubr.f32.mxu0 0.0
  %1266 = vmatmul.mubr.f32.gmra.mrb[0].mxu0 %v1029
  %v1267 = vpop.f32.mrb[0].mxu0
  %v1268 = vadd.f32 0.0, %v1267
  %v1269 = vpop.f32.mrb[0].mxu0
  %1270 = vdwg.mxu0
  %v1271 = vadd.f32 %v364, %v1268
  %v1272 = vxor.u32 %v1271, 2147483648
  %v1273 = vmul.f32 %v1272, 1.442695
  %v1274 = vpow.pop %v1273
  %v1275 = vadd.f32 %v1274, 1.0
  %v1276 = vrcp.pop %v1275
  %v1277 = vmul.f32 1.0, %v1276
  %v1278 = vtanh.pop %v1271
  %v1279 = vmul.f32 %v1277, %v1019
  %1281 = vrot.lane.b32.xlu0 %v1278, 32
  %v1282 = vpop.permute.xlu0 %1281
  %v1284 = vmul.f32 %v1277, %v1282
  %1286 = vrot.lane.b32.xlu0 %v1284, 32
  %v1287 = vpop.permute.xlu0 %1286
  %v1289 = vadd.f32 %v1279, %v1287
  %v1290 = vtanh.pop %v1289
  %1292 = vrot.lane.b32.xlu0 %v1290, 32
  %v1293 = vpop.permute.xlu0 %1292
  %v1295 = vmul.f32 %v1277, %v1293
  %1297 = vrot.lane.b32.xlu0 %v1295, 64
  %v1298 = vpop.permute.xlu0 %1297
  %v1299 = vsel %vm257, %v1298, 0
  %1301 = vmatprep.subr.mxu0 0.0
  %1302 = vmatpush1.msra.mxu0 %v237
  %1303 = vmatprep.subr.mxu0 0.0
  %1304 = vmatpush1.msra.mxu0 %v238
  %1305 = vmatprep.subr.mxu0 0.0
  %1306 = vmatpush1.msra.mxu0 %v239
  %1307 = vmatprep.subr.mxu0 0.0
  %1308 = vmatpush1.msra.mxu0 %v240
  %1309 = vmatprep.subr.mxu0 0.0
  %1310 = vmatpush1.msra.mxu0 0.0
  %1311 = vmatprep.subr.mxu0 0.0
  %1312 = vmatpush1.msra.mxu0 0.0
  %1313 = vmatprep.subr.mxu0 0.0
  %1314 = vmatpush1.msra.mxu0 0.0
  %1315 = vmatprep.subr.mxu0 0.0
  %1316 = vmatpush1.msra.mxu0 0.0
  %1317 = vmatprep.subr.mxu0 0.0
  %1318 = vmatpush1.msra.mxu0 0.0
  %1319 = vmatprep.subr.mxu0 0.0
  %1320 = vmatpush1.msra.mxu0 0.0
  %1321 = vmatprep.subr.mxu0 0.0
  %1322 = vmatpush1.msra.mxu0 0.0
  %1323 = vmatprep.subr.mxu0 0.0
  %1324 = vmatpush1.msra.mxu0 0.0
  %1325 = vmatprep.subr.mxu0 0.0
  %1326 = vmatpush1.msra.mxu0 0.0
  %1327 = vmatprep.subr.mxu0 0.0
  %1328 = vmatpush1.msra.mxu0 0.0
  %1329 = vmatprep.subr.mxu0 0.0
  %1330 = vmatpush1.msra.mxu0 0.0
  %1331 = vmatprep.subr.mxu0 0.0
  %1332 = vmatpush1.msra.mxu0 0.0
  %1333 = vmatprep.subr.mxu0 0.0
  %1334 = vmatpush1.msra.mxu0 0.0
  %1335 = vmatprep.subr.mxu0 0.0
  %1336 = vmatpush1.msra.mxu0 0.0
  %1337 = vmatprep.subr.mxu0 0.0
  %1338 = vmatpush1.msra.mxu0 0.0
  %1339 = vmatprep.subr.mxu0 0.0
  %1340 = vmatpush1.msra.mxu0 0.0
  %1341 = vmatprep.subr.mxu0 0.0
  %1342 = vmatpush1.msra.mxu0 0.0
  %1343 = vmatprep.subr.mxu0 0.0
  %1344 = vmatpush1.msra.mxu0 0.0
  %1345 = vmatprep.subr.mxu0 0.0
  %1346 = vmatpush1.msra.mxu0 0.0
  %1347 = vmatprep.subr.mxu0 0.0
  %1348 = vmatpush1.msra.mxu0 0.0
  %1349 = vmatprep.subr.mxu0 0.0
  %1350 = vmatpush1.msra.mxu0 0.0
  %1351 = vmatprep.subr.mxu0 0.0
  %1352 = vmatpush1.msra.mxu0 0.0
  %1353 = vmatprep.subr.mxu0 0.0
  %1354 = vmatpush1.msra.mxu0 0.0
  %1355 = vmatprep.subr.mxu0 0.0
  %1356 = vmatpush1.msra.mxu0 0.0
  %1357 = vmatprep.subr.mxu0 0.0
  %1358 = vmatpush1.msra.mxu0 0.0
  %1359 = vmatprep.subr.mxu0 0.0
  %1360 = vmatpush1.msra.mxu0 0.0
  %1361 = vmatprep.subr.mxu0 0.0
  %1362 = vmatpush1.msra.mxu0 0.0
  %1363 = vmatprep.subr.mxu0 0.0
  %1364 = vmatpush1.msra.mxu0 0.0
  %1365 = vmatprep.mubr.f32.mxu0 0.0
  %1366 = vmatmul.mubr.f32.gmra.mrb[0].mxu0 %v1299
  %v1367 = vpop.f32.mrb[0].mxu0
  %v1368 = vadd.f32 %v489, %v1367
  %v1369 = vpop.f32.mrb[0].mxu0
  %1370 = vdwg.mxu0
  %1372 = vrot.lane.b32.xlu0 %v1200, 64
  %v1373 = vpop.permute.xlu0 %1372
  %v1374 = vsel %vm257, %v1373, 0
  %1376 = vmatprep.subr.mxu0 0.0
  %1377 = vmatpush1.msra.mxu0 %v245
  %1378 = vmatprep.subr.mxu0 0.0
  %1379 = vmatpush1.msra.mxu0 %v246
  %1380 = vmatprep.subr.mxu0 0.0
  %1381 = vmatpush1.msra.mxu0 %v247
  %1382 = vmatprep.subr.mxu0 0.0
  %1383 = vmatpush1.msra.mxu0 %v248
  %1384 = vmatprep.subr.mxu0 0.0
  %1385 = vmatpush1.msra.mxu0 0.0
  %1386 = vmatprep.subr.mxu0 0.0
  %1387 = vmatpush1.msra.mxu0 0.0
  %1388 = vmatprep.subr.mxu0 0.0
  %1389 = vmatpush1.msra.mxu0 0.0
  %1390 = vmatprep.subr.mxu0 0.0
  %1391 = vmatpush1.msra.mxu0 0.0
  %1392 = vmatprep.subr.mxu0 0.0
  %1393 = vmatpush1.msra.mxu0 0.0
  %1394 = vmatprep.subr.mxu0 0.0
  %1395 = vmatpush1.msra.mxu0 0.0
  %1396 = vmatprep.subr.mxu0 0.0
  %1397 = vmatpush1.msra.mxu0 0.0
  %1398 = vmatprep.subr.mxu0 0.0
  %1399 = vmatpush1.msra.mxu0 0.0
  %1400 = vmatprep.subr.mxu0 0.0
  %1401 = vmatpush1.msra.mxu0 0.0
  %1402 = vmatprep.subr.mxu0 0.0
  %1403 = vmatpush1.msra.mxu0 0.0
  %1404 = vmatprep.subr.mxu0 0.0
  %1405 = vmatpush1.msra.mxu0 0.0
  %1406 = vmatprep.subr.mxu0 0.0
  %1407 = vmatpush1.msra.mxu0 0.0
  %1408 = vmatprep.subr.mxu0 0.0
  %1409 = vmatpush1.msra.mxu0 0.0
  %1410 = vmatprep.subr.mxu0 0.0
  %1411 = vmatpush1.msra.mxu0 0.0
  %1412 = vmatprep.subr.mxu0 0.0
  %1413 = vmatpush1.msra.mxu0 0.0
  %1414 = vmatprep.subr.mxu0 0.0
  %1415 = vmatpush1.msra.mxu0 0.0
  %1416 = vmatprep.subr.mxu0 0.0
  %1417 = vmatpush1.msra.mxu0 0.0
  %1418 = vmatprep.subr.mxu0 0.0
  %1419 = vmatpush1.msra.mxu0 0.0
  %1420 = vmatprep.subr.mxu0 0.0
  %1421 = vmatpush1.msra.mxu0 0.0
  %1422 = vmatprep.subr.mxu0 0.0
  %1423 = vmatpush1.msra.mxu0 0.0
  %1424 = vmatprep.subr.mxu0 0.0
  %1425 = vmatpush1.msra.mxu0 0.0
  %1426 = vmatprep.subr.mxu0 0.0
  %1427 = vmatpush1.msra.mxu0 0.0
  %1428 = vmatprep.subr.mxu0 0.0
  %1429 = vmatpush1.msra.mxu0 0.0
  %1430 = vmatprep.subr.mxu0 0.0
  %1431 = vmatpush1.msra.mxu0 0.0
  %1432 = vmatprep.subr.mxu0 0.0
  %1433 = vmatpush1.msra.mxu0 0.0
  %1434 = vmatprep.subr.mxu0 0.0
  %1435 = vmatpush1.msra.mxu0 0.0
  %1436 = vmatprep.subr.mxu0 0.0
  %1437 = vmatpush1.msra.mxu0 0.0
  %1438 = vmatprep.subr.mxu0 0.0
  %1439 = vmatpush1.msra.mxu0 0.0
  %1440 = vmatprep.mubr.f32.mxu0 0.0
  %1441 = vmatmul.mubr.f32.gmra.mrb[0].mxu0 %v1374
  %v1442 = vpop.f32.mrb[0].mxu0
  %v1443 = vadd.f32 0.0, %v1442
  %v1444 = vpop.f32.mrb[0].mxu0
  %1445 = vdwg.mxu0
  %v1446 = vadd.f32 %v1368, %v1443
  %v1447 = vxor.u32 %v1446, 2147483648
  %v1448 = vmul.f32 %v1447, 1.442695
  %v1449 = vpow.pop %v1448
  %v1450 = vadd.f32 %v1449, 1.0
  %v1451 = vrcp.pop %v1450
  %v1452 = vmul.f32 1.0, %v1451
  %v1453 = vtanh.pop %v1446
  %v1454 = vmul.f32 %v1452, %v1194
  %1456 = vrot.lane.b32.xlu0 %v1453, 32
  %v1457 = vpop.permute.xlu0 %1456
  %v1459 = vmul.f32 %v1452, %v1457
  %1461 = vrot.lane.b32.xlu0 %v1459, 32
  %v1462 = vpop.permute.xlu0 %1461
  %v1464 = vadd.f32 %v1454, %v1462
  %v1465 = vtanh.pop %v1464
  %1467 = vrot.lane.b32.xlu0 %v1465, 32
  %v1468 = vpop.permute.xlu0 %1467
  %v1470 = vmul.f32 %v1452, %v1468
  %1471 = vmatprep.subr.mxu0 0.0
  %1472 = vmatpush1.msra.mxu0 %v241
  %1473 = vmatprep.subr.mxu0 0.0
  %1474 = vmatpush1.msra.mxu0 %v242
  %1475 = vmatprep.subr.mxu0 0.0
  %1476 = vmatpush1.msra.mxu0 %v243
  %1477 = vmatprep.subr.mxu0 0.0
  %1478 = vmatpush1.msra.mxu0 %v244
  %1479 = vmatprep.subr.mxu0 0.0
  %1480 = vmatpush1.msra.mxu0 0.0
  %1481 = vmatprep.subr.mxu0 0.0
  %1482 = vmatpush1.msra.mxu0 0.0
  %1483 = vmatprep.subr.mxu0 0.0
  %1484 = vmatpush1.msra.mxu0 0.0
  %1485 = vmatprep.subr.mxu0 0.0
  %1486 = vmatpush1.msra.mxu0 0.0
  %1487 = vmatprep.subr.mxu0 0.0
  %1488 = vmatpush1.msra.mxu0 0.0
  %1489 = vmatprep.subr.mxu0 0.0
  %1490 = vmatpush1.msra.mxu0 0.0
  %1491 = vmatprep.subr.mxu0 0.0
  %1492 = vmatpush1.msra.mxu0 0.0
  %1493 = vmatprep.subr.mxu0 0.0
  %1494 = vmatpush1.msra.mxu0 0.0
  %1495 = vmatprep.subr.mxu0 0.0
  %1496 = vmatpush1.msra.mxu0 0.0
  %1497 = vmatprep.subr.mxu0 0.0
  %1498 = vmatpush1.msra.mxu0 0.0
  %1499 = vmatprep.subr.mxu0 0.0
  %1500 = vmatpush1.msra.mxu0 0.0
  %1501 = vmatprep.subr.mxu0 0.0
  %1502 = vmatpush1.msra.mxu0 0.0
  %1503 = vmatprep.subr.mxu0 0.0
  %1504 = vmatpush1.msra.mxu0 0.0
  %1505 = vmatprep.subr.mxu0 0.0
  %1506 = vmatpush1.msra.mxu0 0.0
  %1507 = vmatprep.subr.mxu0 0.0
  %1508 = vmatpush1.msra.mxu0 0.0
  %1509 = vmatprep.subr.mxu0 0.0
  %1510 = vmatpush1.msra.mxu0 0.0
  %1511 = vmatprep.subr.mxu0 0.0
  %1512 = vmatpush1.msra.mxu0 0.0
  %1513 = vmatprep.subr.mxu0 0.0
  %1514 = vmatpush1.msra.mxu0 0.0
  %1515 = vmatprep.subr.mxu0 0.0
  %1516 = vmatpush1.msra.mxu0 0.0
  %1517 = vmatprep.subr.mxu0 0.0
  %1518 = vmatpush1.msra.mxu0 0.0
  %1519 = vmatprep.subr.mxu0 0.0
  %1520 = vmatpush1.msra.mxu0 0.0
  %1521 = vmatprep.subr.mxu0 0.0
  %1522 = vmatpush1.msra.mxu0 0.0
  %1523 = vmatprep.subr.mxu0 0.0
  %1524 = vmatpush1.msra.mxu0 0.0
  %1525 = vmatprep.subr.mxu0 0.0
  %1526 = vmatpush1.msra.mxu0 0.0
  %1527 = vmatprep.subr.mxu0 0.0
  %1528 = vmatpush1.msra.mxu0 0.0
  %1529 = vmatprep.subr.mxu0 0.0
  %1530 = vmatpush1.msra.mxu0 0.0
  %1531 = vmatprep.subr.mxu0 0.0
  %1532 = vmatpush1.msra.mxu0 0.0
  %1533 = vmatprep.subr.mxu0 0.0
  %1534 = vmatpush1.msra.mxu0 0.0
  %1535 = vmatprep.mubr.f32.mxu0 0.0
  %1536 = vmatmul.mubr.f32.gmra.mrb[0].mxu0 %v1299
  %v1537 = vpop.f32.mrb[0].mxu0
  %v1538 = vadd.f32 0.0, %v1537
  %v1539 = vpop.f32.mrb[0].mxu0
  %1540 = vdwg.mxu0
  %v1541 = vadd.f32 %v369, %v1538
  %v1542 = vxor.u32 %v1541, 2147483648
  %v1543 = vmul.f32 %v1542, 1.442695
  %v1544 = vpow.pop %v1543
  %v1545 = vadd.f32 %v1544, 1.0
  %v1546 = vrcp.pop %v1545
  %v1547 = vmul.f32 1.0, %v1546
  %v1548 = vtanh.pop %v1541
  %v1549 = vmul.f32 %v1547, %v1289
  %1551 = vrot.lane.b32.xlu0 %v1548, 32
  %v1552 = vpop.permute.xlu0 %1551
  %v1554 = vmul.f32 %v1547, %v1552
  %1556 = vrot.lane.b32.xlu0 %v1554, 32
  %v1557 = vpop.permute.xlu0 %1556
  %v1559 = vadd.f32 %v1549, %v1557
  %v1560 = vtanh.pop %v1559
  %1562 = vrot.lane.b32.xlu0 %v1560, 32
  %v1563 = vpop.permute.xlu0 %1562
  %v1565 = vmul.f32 %v1547, %v1563
  %1567 = vrot.lane.b32.xlu0 %v1565, 64
  %v1568 = vpop.permute.xlu0 %1567
  %v1569 = vsel %vm257, %v1568, 0
  %1571 = vmatprep.subr.mxu0 0.0
  %1572 = vmatpush1.msra.mxu0 %v237
  %1573 = vmatprep.subr.mxu0 0.0
  %1574 = vmatpush1.msra.mxu0 %v238
  %1575 = vmatprep.subr.mxu0 0.0
  %1576 = vmatpush1.msra.mxu0 %v239
  %1577 = vmatprep.subr.mxu0 0.0
  %1578 = vmatpush1.msra.mxu0 %v240
  %1579 = vmatprep.subr.mxu0 0.0
  %1580 = vmatpush1.msra.mxu0 0.0
  %1581 = vmatprep.subr.mxu0 0.0
  %1582 = vmatpush1.msra.mxu0 0.0
  %1583 = vmatprep.subr.mxu0 0.0
  %1584 = vmatpush1.msra.mxu0 0.0
  %1585 = vmatprep.subr.mxu0 0.0
  %1586 = vmatpush1.msra.mxu0 0.0
  %1587 = vmatprep.subr.mxu0 0.0
  %1588 = vmatpush1.msra.mxu0 0.0
  %1589 = vmatprep.subr.mxu0 0.0
  %1590 = vmatpush1.msra.mxu0 0.0
  %1591 = vmatprep.subr.mxu0 0.0
  %1592 = vmatpush1.msra.mxu0 0.0
  %1593 = vmatprep.subr.mxu0 0.0
  %1594 = vmatpush1.msra.mxu0 0.0
  %1595 = vmatprep.subr.mxu0 0.0
  %1596 = vmatpush1.msra.mxu0 0.0
  %1597 = vmatprep.subr.mxu0 0.0
  %1598 = vmatpush1.msra.mxu0 0.0
  %1599 = vmatprep.subr.mxu0 0.0
  %1600 = vmatpush1.msra.mxu0 0.0
  %1601 = vmatprep.subr.mxu0 0.0
  %1602 = vmatpush1.msra.mxu0 0.0
  %1603 = vmatprep.subr.mxu0 0.0
  %1604 = vmatpush1.msra.mxu0 0.0
  %1605 = vmatprep.subr.mxu0 0.0
  %1606 = vmatpush1.msra.mxu0 0.0
  %1607 = vmatprep.subr.mxu0 0.0
  %1608 = vmatpush1.msra.mxu0 0.0
  %1609 = vmatprep.subr.mxu0 0.0
  %1610 = vmatpush1.msra.mxu0 0.0
  %1611 = vmatprep.subr.mxu0 0.0
  %1612 = vmatpush1.msra.mxu0 0.0
  %1613 = vmatprep.subr.mxu0 0.0
  %1614 = vmatpush1.msra.mxu0 0.0
  %1615 = vmatprep.subr.mxu0 0.0
  %1616 = vmatpush1.msra.mxu0 0.0
  %1617 = vmatprep.subr.mxu0 0.0
  %1618 = vmatpush1.msra.mxu0 0.0
  %1619 = vmatprep.subr.mxu0 0.0
  %1620 = vmatpush1.msra.mxu0 0.0
  %1621 = vmatprep.subr.mxu0 0.0
  %1622 = vmatpush1.msra.mxu0 0.0
  %1623 = vmatprep.subr.mxu0 0.0
  %1624 = vmatpush1.msra.mxu0 0.0
  %1625 = vmatprep.subr.mxu0 0.0
  %1626 = vmatpush1.msra.mxu0 0.0
  %1627 = vmatprep.subr.mxu0 0.0
  %1628 = vmatpush1.msra.mxu0 0.0
  %1629 = vmatprep.subr.mxu0 0.0
  %1630 = vmatpush1.msra.mxu0 0.0
  %1631 = vmatprep.subr.mxu0 0.0
  %1632 = vmatpush1.msra.mxu0 0.0
  %1633 = vmatprep.subr.mxu0 0.0
  %1634 = vmatpush1.msra.mxu0 0.0
  %1635 = vmatprep.mubr.f32.mxu0 0.0
  %1636 = vmatmul.mubr.f32.gmra.mrb[0].mxu0 %v1569
  %v1637 = vpop.f32.mrb[0].mxu0
  %v1638 = vadd.f32 %v489, %v1637
  %v1639 = vpop.f32.mrb[0].mxu0
  %1640 = vdwg.mxu0
  %1642 = vrot.lane.b32.xlu0 %v1470, 64
  %v1643 = vpop.permute.xlu0 %1642
  %v1644 = vsel %vm257, %v1643, 0
  %1646 = vmatprep.subr.mxu0 0.0
  %1647 = vmatpush1.msra.mxu0 %v245
  %1648 = vmatprep.subr.mxu0 0.0
  %1649 = vmatpush1.msra.mxu0 %v246
  %1650 = vmatprep.subr.mxu0 0.0
  %1651 = vmatpush1.msra.mxu0 %v247
  %1652 = vmatprep.subr.mxu0 0.0
  %1653 = vmatpush1.msra.mxu0 %v248
  %1654 = vmatprep.subr.mxu0 0.0
  %1655 = vmatpush1.msra.mxu0 0.0
  %1656 = vmatprep.subr.mxu0 0.0
  %1657 = vmatpush1.msra.mxu0 0.0
  %1658 = vmatprep.subr.mxu0 0.0
  %1659 = vmatpush1.msra.mxu0 0.0
  %1660 = vmatprep.subr.mxu0 0.0
  %1661 = vmatpush1.msra.mxu0 0.0
  %1662 = vmatprep.subr.mxu0 0.0
  %1663 = vmatpush1.msra.mxu0 0.0
  %1664 = vmatprep.subr.mxu0 0.0
  %1665 = vmatpush1.msra.mxu0 0.0
  %1666 = vmatprep.subr.mxu0 0.0
  %1667 = vmatpush1.msra.mxu0 0.0
  %1668 = vmatprep.subr.mxu0 0.0
  %1669 = vmatpush1.msra.mxu0 0.0
  %1670 = vmatprep.subr.mxu0 0.0
  %1671 = vmatpush1.msra.mxu0 0.0
  %1672 = vmatprep.subr.mxu0 0.0
  %1673 = vmatpush1.msra.mxu0 0.0
  %1674 = vmatprep.subr.mxu0 0.0
  %1675 = vmatpush1.msra.mxu0 0.0
  %1676 = vmatprep.subr.mxu0 0.0
  %1677 = vmatpush1.msra.mxu0 0.0
  %1678 = vmatprep.subr.mxu0 0.0
  %1679 = vmatpush1.msra.mxu0 0.0
  %1680 = vmatprep.subr.mxu0 0.0
  %1681 = vmatpush1.msra.mxu0 0.0
  %1682 = vmatprep.subr.mxu0 0.0
  %1683 = vmatpush1.msra.mxu0 0.0
  %1684 = vmatprep.subr.mxu0 0.0
  %1685 = vmatpush1.msra.mxu0 0.0
  %1686 = vmatprep.subr.mxu0 0.0
  %1687 = vmatpush1.msra.mxu0 0.0
  %1688 = vmatprep.subr.mxu0 0.0
  %1689 = vmatpush1.msra.mxu0 0.0
  %1690 = vmatprep.subr.mxu0 0.0
  %1691 = vmatpush1.msra.mxu0 0.0
  %1692 = vmatprep.subr.mxu0 0.0
  %1693 = vmatpush1.msra.mxu0 0.0
  %1694 = vmatprep.subr.mxu0 0.0
  %1695 = vmatpush1.msra.mxu0 0.0
  %1696 = vmatprep.subr.mxu0 0.0
  %1697 = vmatpush1.msra.mxu0 0.0
  %1698 = vmatprep.subr.mxu0 0.0
  %1699 = vmatpush1.msra.mxu0 0.0
  %1700 = vmatprep.subr.mxu0 0.0
  %1701 = vmatpush1.msra.mxu0 0.0
  %1702 = vmatprep.subr.mxu0 0.0
  %1703 = vmatpush1.msra.mxu0 0.0
  %1704 = vmatprep.subr.mxu0 0.0
  %1705 = vmatpush1.msra.mxu0 0.0
  %1706 = vmatprep.subr.mxu0 0.0
  %1707 = vmatpush1.msra.mxu0 0.0
  %1708 = vmatprep.subr.mxu0 0.0
  %1709 = vmatpush1.msra.mxu0 0.0
  %1710 = vmatprep.mubr.f32.mxu0 0.0
  %1711 = vmatmul.mubr.f32.gmra.mrb[0].mxu0 %v1644
  %v1712 = vpop.f32.mrb[0].mxu0
  %v1713 = vadd.f32 0.0, %v1712
  %v1714 = vpop.f32.mrb[0].mxu0
  %1715 = vdwg.mxu0
  %v1716 = vadd.f32 %v1638, %v1713
  %v1717 = vxor.u32 %v1716, 2147483648
  %v1718 = vmul.f32 %v1717, 1.442695
  %v1719 = vpow.pop %v1718
  %v1720 = vadd.f32 %v1719, 1.0
  %v1721 = vrcp.pop %v1720
  %v1722 = vmul.f32 1.0, %v1721
  %v1723 = vtanh.pop %v1716
  %v1724 = vmul.f32 %v1722, %v1464
  %1726 = vrot.lane.b32.xlu0 %v1723, 32
  %v1727 = vpop.permute.xlu0 %1726
  %v1729 = vmul.f32 %v1722, %v1727
  %1731 = vrot.lane.b32.xlu0 %v1729, 32
  %v1732 = vpop.permute.xlu0 %1731
  %v1734 = vadd.f32 %v1724, %v1732
  %v1735 = vtanh.pop %v1734
  %1737 = vrot.lane.b32.xlu0 %v1735, 32
  %v1738 = vpop.permute.xlu0 %1737
  %v1740 = vmul.f32 %v1722, %v1738
  %1741 = vmatprep.subr.mxu0 0.0
  %1742 = vmatpush1.msra.mxu0 %v241
  %1743 = vmatprep.subr.mxu0 0.0
  %1744 = vmatpush1.msra.mxu0 %v242
  %1745 = vmatprep.subr.mxu0 0.0
  %1746 = vmatpush1.msra.mxu0 %v243
  %1747 = vmatprep.subr.mxu0 0.0
  %1748 = vmatpush1.msra.mxu0 %v244
  %1749 = vmatprep.subr.mxu0 0.0
  %1750 = vmatpush1.msra.mxu0 0.0
  %1751 = vmatprep.subr.mxu0 0.0
  %1752 = vmatpush1.msra.mxu0 0.0
  %1753 = vmatprep.subr.mxu0 0.0
  %1754 = vmatpush1.msra.mxu0 0.0
  %1755 = vmatprep.subr.mxu0 0.0
  %1756 = vmatpush1.msra.mxu0 0.0
  %1757 = vmatprep.subr.mxu0 0.0
  %1758 = vmatpush1.msra.mxu0 0.0
  %1759 = vmatprep.subr.mxu0 0.0
  %1760 = vmatpush1.msra.mxu0 0.0
  %1761 = vmatprep.subr.mxu0 0.0
  %1762 = vmatpush1.msra.mxu0 0.0
  %1763 = vmatprep.subr.mxu0 0.0
  %1764 = vmatpush1.msra.mxu0 0.0
  %1765 = vmatprep.subr.mxu0 0.0
  %1766 = vmatpush1.msra.mxu0 0.0
  %1767 = vmatprep.subr.mxu0 0.0
  %1768 = vmatpush1.msra.mxu0 0.0
  %1769 = vmatprep.subr.mxu0 0.0
  %1770 = vmatpush1.msra.mxu0 0.0
  %1771 = vmatprep.subr.mxu0 0.0
  %1772 = vmatpush1.msra.mxu0 0.0
  %1773 = vmatprep.subr.mxu0 0.0
  %1774 = vmatpush1.msra.mxu0 0.0
  %1775 = vmatprep.subr.mxu0 0.0
  %1776 = vmatpush1.msra.mxu0 0.0
  %1777 = vmatprep.subr.mxu0 0.0
  %1778 = vmatpush1.msra.mxu0 0.0
  %1779 = vmatprep.subr.mxu0 0.0
  %1780 = vmatpush1.msra.mxu0 0.0
  %1781 = vmatprep.subr.mxu0 0.0
  %1782 = vmatpush1.msra.mxu0 0.0
  %1783 = vmatprep.subr.mxu0 0.0
  %1784 = vmatpush1.msra.mxu0 0.0
  %1785 = vmatprep.subr.mxu0 0.0
  %1786 = vmatpush1.msra.mxu0 0.0
  %1787 = vmatprep.subr.mxu0 0.0
  %1788 = vmatpush1.msra.mxu0 0.0
  %1789 = vmatprep.subr.mxu0 0.0
  %1790 = vmatpush1.msra.mxu0 0.0
  %1791 = vmatprep.subr.mxu0 0.0
  %1792 = vmatpush1.msra.mxu0 0.0
  %1793 = vmatprep.subr.mxu0 0.0
  %1794 = vmatpush1.msra.mxu0 0.0
  %1795 = vmatprep.subr.mxu0 0.0
  %1796 = vmatpush1.msra.mxu0 0.0
  %1797 = vmatprep.subr.mxu0 0.0
  %1798 = vmatpush1.msra.mxu0 0.0
  %1799 = vmatprep.subr.mxu0 0.0
  %1800 = vmatpush1.msra.mxu0 0.0
  %1801 = vmatprep.subr.mxu0 0.0
  %1802 = vmatpush1.msra.mxu0 0.0
  %1803 = vmatprep.subr.mxu0 0.0
  %1804 = vmatpush1.msra.mxu0 0.0
  %1805 = vmatprep.mubr.f32.mxu0 0.0
  %1806 = vmatmul.mubr.f32.gmra.mrb[0].mxu0 %v1569
  %v1807 = vpop.f32.mrb[0].mxu0
  %v1808 = vadd.f32 0.0, %v1807
  %v1809 = vpop.f32.mrb[0].mxu0
  %1810 = vdwg.mxu0
  %v1811 = vadd.f32 %v374, %v1808
  %v1812 = vxor.u32 %v1811, 2147483648
  %v1813 = vmul.f32 %v1812, 1.442695
  %v1814 = vpow.pop %v1813
  %v1815 = vadd.f32 %v1814, 1.0
  %v1816 = vrcp.pop %v1815
  %v1817 = vmul.f32 1.0, %v1816
  %v1818 = vtanh.pop %v1811
  %v1819 = vmul.f32 %v1817, %v1559
  %1821 = vrot.lane.b32.xlu0 %v1818, 32
  %v1822 = vpop.permute.xlu0 %1821
  %v1824 = vmul.f32 %v1817, %v1822
  %1826 = vrot.lane.b32.xlu0 %v1824, 32
  %v1827 = vpop.permute.xlu0 %1826
  %v1829 = vadd.f32 %v1819, %v1827
  %v1830 = vtanh.pop %v1829
  %1832 = vrot.lane.b32.xlu0 %v1830, 32
  %v1833 = vpop.permute.xlu0 %1832
  %v1835 = vmul.f32 %v1817, %v1833
  %1837 = vrot.lane.b32.xlu0 %v1835, 64
  %v1838 = vpop.permute.xlu0 %1837
  %v1839 = vsel %vm257, %v1838, 0
  %1841 = vmatprep.subr.mxu0 0.0
  %1842 = vmatpush1.msra.mxu0 %v237
  %1843 = vmatprep.subr.mxu0 0.0
  %1844 = vmatpush1.msra.mxu0 %v238
  %1845 = vmatprep.subr.mxu0 0.0
  %1846 = vmatpush1.msra.mxu0 %v239
  %1847 = vmatprep.subr.mxu0 0.0
  %1848 = vmatpush1.msra.mxu0 %v240
  %1849 = vmatprep.subr.mxu0 0.0
  %1850 = vmatpush1.msra.mxu0 0.0
  %1851 = vmatprep.subr.mxu0 0.0
  %1852 = vmatpush1.msra.mxu0 0.0
  %1853 = vmatprep.subr.mxu0 0.0
  %1854 = vmatpush1.msra.mxu0 0.0
  %1855 = vmatprep.subr.mxu0 0.0
  %1856 = vmatpush1.msra.mxu0 0.0
  %1857 = vmatprep.subr.mxu0 0.0
  %1858 = vmatpush1.msra.mxu0 0.0
  %1859 = vmatprep.subr.mxu0 0.0
  %1860 = vmatpush1.msra.mxu0 0.0
  %1861 = vmatprep.subr.mxu0 0.0
  %1862 = vmatpush1.msra.mxu0 0.0
  %1863 = vmatprep.subr.mxu0 0.0
  %1864 = vmatpush1.msra.mxu0 0.0
  %1865 = vmatprep.subr.mxu0 0.0
  %1866 = vmatpush1.msra.mxu0 0.0
  %1867 = vmatprep.subr.mxu0 0.0
  %1868 = vmatpush1.msra.mxu0 0.0
  %1869 = vmatprep.subr.mxu0 0.0
  %1870 = vmatpush1.msra.mxu0 0.0
  %1871 = vmatprep.subr.mxu0 0.0
  %1872 = vmatpush1.msra.mxu0 0.0
  %1873 = vmatprep.subr.mxu0 0.0
  %1874 = vmatpush1.msra.mxu0 0.0
  %1875 = vmatprep.subr.mxu0 0.0
  %1876 = vmatpush1.msra.mxu0 0.0
  %1877 = vmatprep.subr.mxu0 0.0
  %1878 = vmatpush1.msra.mxu0 0.0
  %1879 = vmatprep.subr.mxu0 0.0
  %1880 = vmatpush1.msra.mxu0 0.0
  %1881 = vmatprep.subr.mxu0 0.0
  %1882 = vmatpush1.msra.mxu0 0.0
  %1883 = vmatprep.subr.mxu0 0.0
  %1884 = vmatpush1.msra.mxu0 0.0
  %1885 = vmatprep.subr.mxu0 0.0
  %1886 = vmatpush1.msra.mxu0 0.0
  %1887 = vmatprep.subr.mxu0 0.0
  %1888 = vmatpush1.msra.mxu0 0.0
  %1889 = vmatprep.subr.mxu0 0.0
  %1890 = vmatpush1.msra.mxu0 0.0
  %1891 = vmatprep.subr.mxu0 0.0
  %1892 = vmatpush1.msra.mxu0 0.0
  %1893 = vmatprep.subr.mxu0 0.0
  %1894 = vmatpush1.msra.mxu0 0.0
  %1895 = vmatprep.subr.mxu0 0.0
  %1896 = vmatpush1.msra.mxu0 0.0
  %1897 = vmatprep.subr.mxu0 0.0
  %1898 = vmatpush1.msra.mxu0 0.0
  %1899 = vmatprep.subr.mxu0 0.0
  %1900 = vmatpush1.msra.mxu0 0.0
  %1901 = vmatprep.subr.mxu0 0.0
  %1902 = vmatpush1.msra.mxu0 0.0
  %1903 = vmatprep.subr.mxu0 0.0
  %1904 = vmatpush1.msra.mxu0 0.0
  %1905 = vmatprep.mubr.f32.mxu0 0.0
  %1906 = vmatmul.mubr.f32.gmra.mrb[0].mxu0 %v1839
  %v1907 = vpop.f32.mrb[0].mxu0
  %v1908 = vadd.f32 %v489, %v1907
  %v1909 = vpop.f32.mrb[0].mxu0
  %1910 = vdwg.mxu0
  %1912 = vrot.lane.b32.xlu0 %v1740, 64
  %v1913 = vpop.permute.xlu0 %1912
  %v1914 = vsel %vm257, %v1913, 0
  %1916 = vmatprep.subr.mxu0 0.0
  %1917 = vmatpush1.msra.mxu0 %v245
  %1918 = vmatprep.subr.mxu0 0.0
  %1919 = vmatpush1.msra.mxu0 %v246
  %1920 = vmatprep.subr.mxu0 0.0
  %1921 = vmatpush1.msra.mxu0 %v247
  %1922 = vmatprep.subr.mxu0 0.0
  %1923 = vmatpush1.msra.mxu0 %v248
  %1924 = vmatprep.subr.mxu0 0.0
  %1925 = vmatpush1.msra.mxu0 0.0
  %1926 = vmatprep.subr.mxu0 0.0
  %1927 = vmatpush1.msra.mxu0 0.0
  %1928 = vmatprep.subr.mxu0 0.0
  %1929 = vmatpush1.msra.mxu0 0.0
  %1930 = vmatprep.subr.mxu0 0.0
  %1931 = vmatpush1.msra.mxu0 0.0
  %1932 = vmatprep.subr.mxu0 0.0
  %1933 = vmatpush1.msra.mxu0 0.0
  %1934 = vmatprep.subr.mxu0 0.0
  %1935 = vmatpush1.msra.mxu0 0.0
  %1936 = vmatprep.subr.mxu0 0.0
  %1937 = vmatpush1.msra.mxu0 0.0
  %1938 = vmatprep.subr.mxu0 0.0
  %1939 = vmatpush1.msra.mxu0 0.0
  %1940 = vmatprep.subr.mxu0 0.0
  %1941 = vmatpush1.msra.mxu0 0.0
  %1942 = vmatprep.subr.mxu0 0.0
  %1943 = vmatpush1.msra.mxu0 0.0
  %1944 = vmatprep.subr.mxu0 0.0
  %1945 = vmatpush1.msra.mxu0 0.0
  %1946 = vmatprep.subr.mxu0 0.0
  %1947 = vmatpush1.msra.mxu0 0.0
  %1948 = vmatprep.subr.mxu0 0.0
  %1949 = vmatpush1.msra.mxu0 0.0
  %1950 = vmatprep.subr.mxu0 0.0
  %1951 = vmatpush1.msra.mxu0 0.0
  %1952 = vmatprep.subr.mxu0 0.0
  %1953 = vmatpush1.msra.mxu0 0.0
  %1954 = vmatprep.subr.mxu0 0.0
  %1955 = vmatpush1.msra.mxu0 0.0
  %1956 = vmatprep.subr.mxu0 0.0
  %1957 = vmatpush1.msra.mxu0 0.0
  %1958 = vmatprep.subr.mxu0 0.0
  %1959 = vmatpush1.msra.mxu0 0.0
  %1960 = vmatprep.subr.mxu0 0.0
  %1961 = vmatpush1.msra.mxu0 0.0
  %1962 = vmatprep.subr.mxu0 0.0
  %1963 = vmatpush1.msra.mxu0 0.0
  %1964 = vmatprep.subr.mxu0 0.0
  %1965 = vmatpush1.msra.mxu0 0.0
  %1966 = vmatprep.subr.mxu0 0.0
  %1967 = vmatpush1.msra.mxu0 0.0
  %1968 = vmatprep.subr.mxu0 0.0
  %1969 = vmatpush1.msra.mxu0 0.0
  %1970 = vmatprep.subr.mxu0 0.0
  %1971 = vmatpush1.msra.mxu0 0.0
  %1972 = vmatprep.subr.mxu0 0.0
  %1973 = vmatpush1.msra.mxu0 0.0
  %1974 = vmatprep.subr.mxu0 0.0
  %1975 = vmatpush1.msra.mxu0 0.0
  %1976 = vmatprep.subr.mxu0 0.0
  %1977 = vmatpush1.msra.mxu0 0.0
  %1978 = vmatprep.subr.mxu0 0.0
  %1979 = vmatpush1.msra.mxu0 0.0
  %1980 = vmatprep.mubr.f32.mxu0 0.0
  %1981 = vmatmul.mubr.f32.gmra.mrb[0].mxu0 %v1914
  %v1982 = vpop.f32.mrb[0].mxu0
  %v1983 = vadd.f32 0.0, %v1982
  %v1984 = vpop.f32.mrb[0].mxu0
  %1985 = vdwg.mxu0
  %v1986 = vadd.f32 %v1908, %v1983
  %v1987 = vxor.u32 %v1986, 2147483648
  %v1988 = vmul.f32 %v1987, 1.442695
  %v1989 = vpow.pop %v1988
  %v1990 = vadd.f32 %v1989, 1.0
  %v1991 = vrcp.pop %v1990
  %v1992 = vmul.f32 1.0, %v1991
  %v1993 = vtanh.pop %v1986
  %v1994 = vmul.f32 %v1992, %v1734
  %1996 = vrot.lane.b32.xlu0 %v1993, 32
  %v1997 = vpop.permute.xlu0 %1996
  %v1999 = vmul.f32 %v1992, %v1997
  %2001 = vrot.lane.b32.xlu0 %v1999, 32
  %v2002 = vpop.permute.xlu0 %2001
  %v2004 = vadd.f32 %v1994, %v2002
  %v2005 = vtanh.pop %v2004
  %2007 = vrot.lane.b32.xlu0 %v2005, 32
  %v2008 = vpop.permute.xlu0 %2007
  %v2010 = vmul.f32 %v1992, %v2008
  %2011 = vmatprep.subr.mxu0 0.0
  %2012 = vmatpush1.msra.mxu0 %v241
  %2013 = vmatprep.subr.mxu0 0.0
  %2014 = vmatpush1.msra.mxu0 %v242
  %2015 = vmatprep.subr.mxu0 0.0
  %2016 = vmatpush1.msra.mxu0 %v243
  %2017 = vmatprep.subr.mxu0 0.0
  %2018 = vmatpush1.msra.mxu0 %v244
  %2019 = vmatprep.subr.mxu0 0.0
  %2020 = vmatpush1.msra.mxu0 0.0
  %2021 = vmatprep.subr.mxu0 0.0
  %2022 = vmatpush1.msra.mxu0 0.0
  %2023 = vmatprep.subr.mxu0 0.0
  %2024 = vmatpush1.msra.mxu0 0.0
  %2025 = vmatprep.subr.mxu0 0.0
  %2026 = vmatpush1.msra.mxu0 0.0
  %2027 = vmatprep.subr.mxu0 0.0
  %2028 = vmatpush1.msra.mxu0 0.0
  %2029 = vmatprep.subr.mxu0 0.0
  %2030 = vmatpush1.msra.mxu0 0.0
  %2031 = vmatprep.subr.mxu0 0.0
  %2032 = vmatpush1.msra.mxu0 0.0
  %2033 = vmatprep.subr.mxu0 0.0
  %2034 = vmatpush1.msra.mxu0 0.0
  %2035 = vmatprep.subr.mxu0 0.0
  %2036 = vmatpush1.msra.mxu0 0.0
  %2037 = vmatprep.subr.mxu0 0.0
  %2038 = vmatpush1.msra.mxu0 0.0
  %2039 = vmatprep.subr.mxu0 0.0
  %2040 = vmatpush1.msra.mxu0 0.0
  %2041 = vmatprep.subr.mxu0 0.0
  %2042 = vmatpush1.msra.mxu0 0.0
  %2043 = vmatprep.subr.mxu0 0.0
  %2044 = vmatpush1.msra.mxu0 0.0
  %2045 = vmatprep.subr.mxu0 0.0
  %2046 = vmatpush1.msra.mxu0 0.0
  %2047 = vmatprep.subr.mxu0 0.0
  %2048 = vmatpush1.msra.mxu0 0.0
  %2049 = vmatprep.subr.mxu0 0.0
  %2050 = vmatpush1.msra.mxu0 0.0
  %2051 = vmatprep.subr.mxu0 0.0
  %2052 = vmatpush1.msra.mxu0 0.0
  %2053 = vmatprep.subr.mxu0 0.0
  %2054 = vmatpush1.msra.mxu0 0.0
  %2055 = vmatprep.subr.mxu0 0.0
  %2056 = vmatpush1.msra.mxu0 0.0
  %2057 = vmatprep.subr.mxu0 0.0
  %2058 = vmatpush1.msra.mxu0 0.0
  %2059 = vmatprep.subr.mxu0 0.0
  %2060 = vmatpush1.msra.mxu0 0.0
  %2061 = vmatprep.subr.mxu0 0.0
  %2062 = vmatpush1.msra.mxu0 0.0
  %2063 = vmatprep.subr.mxu0 0.0
  %2064 = vmatpush1.msra.mxu0 0.0
  %2065 = vmatprep.subr.mxu0 0.0
  %2066 = vmatpush1.msra.mxu0 0.0
  %2067 = vmatprep.subr.mxu0 0.0
  %2068 = vmatpush1.msra.mxu0 0.0
  %2069 = vmatprep.subr.mxu0 0.0
  %2070 = vmatpush1.msra.mxu0 0.0
  %2071 = vmatprep.subr.mxu0 0.0
  %2072 = vmatpush1.msra.mxu0 0.0
  %2073 = vmatprep.subr.mxu0 0.0
  %2074 = vmatpush1.msra.mxu0 0.0
  %2075 = vmatprep.mubr.f32.mxu0 0.0
  %2076 = vmatmul.mubr.f32.gmra.mrb[0].mxu0 %v1839
  %v2077 = vpop.f32.mrb[0].mxu0
  %v2078 = vadd.f32 0.0, %v2077
  %v2079 = vpop.f32.mrb[0].mxu0
  %2080 = vdwg.mxu0
  %v2081 = vadd.f32 %v379, %v2078
  %v2082 = vxor.u32 %v2081, 2147483648
  %v2083 = vmul.f32 %v2082, 1.442695
  %v2084 = vpow.pop %v2083
  %v2085 = vadd.f32 %v2084, 1.0
  %v2086 = vrcp.pop %v2085
  %v2087 = vmul.f32 1.0, %v2086
  %v2088 = vtanh.pop %v2081
  %v2089 = vmul.f32 %v2087, %v1829
  %2091 = vrot.lane.b32.xlu0 %v2088, 32
  %v2092 = vpop.permute.xlu0 %2091
  %v2094 = vmul.f32 %v2087, %v2092
  %2096 = vrot.lane.b32.xlu0 %v2094, 32
  %v2097 = vpop.permute.xlu0 %2096
  %v2099 = vadd.f32 %v2089, %v2097
  %v2100 = vtanh.pop %v2099
  %2102 = vrot.lane.b32.xlu0 %v2100, 32
  %v2103 = vpop.permute.xlu0 %2102
  %v2105 = vmul.f32 %v2087, %v2103
  %2107 = vrot.lane.b32.xlu0 %v2105, 64
  %v2108 = vpop.permute.xlu0 %2107
  %v2109 = vsel %vm257, %v2108, 0
  %2111 = vmatprep.subr.mxu0 0.0
  %2112 = vmatpush1.msra.mxu0 %v237
  %2113 = vmatprep.subr.mxu0 0.0
  %2114 = vmatpush1.msra.mxu0 %v238
  %2115 = vmatprep.subr.mxu0 0.0
  %2116 = vmatpush1.msra.mxu0 %v239
  %2117 = vmatprep.subr.mxu0 0.0
  %2118 = vmatpush1.msra.mxu0 %v240
  %2119 = vmatprep.subr.mxu0 0.0
  %2120 = vmatpush1.msra.mxu0 0.0
  %2121 = vmatprep.subr.mxu0 0.0
  %2122 = vmatpush1.msra.mxu0 0.0
  %2123 = vmatprep.subr.mxu0 0.0
  %2124 = vmatpush1.msra.mxu0 0.0
  %2125 = vmatprep.subr.mxu0 0.0
  %2126 = vmatpush1.msra.mxu0 0.0
  %2127 = vmatprep.subr.mxu0 0.0
  %2128 = vmatpush1.msra.mxu0 0.0
  %2129 = vmatprep.subr.mxu0 0.0
  %2130 = vmatpush1.msra.mxu0 0.0
  %2131 = vmatprep.subr.mxu0 0.0
  %2132 = vmatpush1.msra.mxu0 0.0
  %2133 = vmatprep.subr.mxu0 0.0
  %2134 = vmatpush1.msra.mxu0 0.0
  %2135 = vmatprep.subr.mxu0 0.0
  %2136 = vmatpush1.msra.mxu0 0.0
  %2137 = vmatprep.subr.mxu0 0.0
  %2138 = vmatpush1.msra.mxu0 0.0
  %2139 = vmatprep.subr.mxu0 0.0
  %2140 = vmatpush1.msra.mxu0 0.0
  %2141 = vmatprep.subr.mxu0 0.0
  %2142 = vmatpush1.msra.mxu0 0.0
  %2143 = vmatprep.subr.mxu0 0.0
  %2144 = vmatpush1.msra.mxu0 0.0
  %2145 = vmatprep.subr.mxu0 0.0
  %2146 = vmatpush1.msra.mxu0 0.0
  %2147 = vmatprep.subr.mxu0 0.0
  %2148 = vmatpush1.msra.mxu0 0.0
  %2149 = vmatprep.subr.mxu0 0.0
  %2150 = vmatpush1.msra.mxu0 0.0
  %2151 = vmatprep.subr.mxu0 0.0
  %2152 = vmatpush1.msra.mxu0 0.0
  %2153 = vmatprep.subr.mxu0 0.0
  %2154 = vmatpush1.msra.mxu0 0.0
  %2155 = vmatprep.subr.mxu0 0.0
  %2156 = vmatpush1.msra.mxu0 0.0
  %2157 = vmatprep.subr.mxu0 0.0
  %2158 = vmatpush1.msra.mxu0 0.0
  %2159 = vmatprep.subr.mxu0 0.0
  %2160 = vmatpush1.msra.mxu0 0.0
  %2161 = vmatprep.subr.mxu0 0.0
  %2162 = vmatpush1.msra.mxu0 0.0
  %2163 = vmatprep.subr.mxu0 0.0
  %2164 = vmatpush1.msra.mxu0 0.0
  %2165 = vmatprep.subr.mxu0 0.0
  %2166 = vmatpush1.msra.mxu0 0.0
  %2167 = vmatprep.subr.mxu0 0.0
  %2168 = vmatpush1.msra.mxu0 0.0
  %2169 = vmatprep.subr.mxu0 0.0
  %2170 = vmatpush1.msra.mxu0 0.0
  %2171 = vmatprep.subr.mxu0 0.0
  %2172 = vmatpush1.msra.mxu0 0.0
  %2173 = vmatprep.subr.mxu0 0.0
  %2174 = vmatpush1.msra.mxu0 0.0
  %2175 = vmatprep.mubr.f32.mxu0 0.0
  %2176 = vmatmul.mubr.f32.gmra.mrb[0].mxu0 %v2109
  %v2177 = vpop.f32.mrb[0].mxu0
  %v2178 = vadd.f32 %v489, %v2177
  %v2179 = vpop.f32.mrb[0].mxu0
  %2180 = vdwg.mxu0
  %2182 = vrot.lane.b32.xlu0 %v2010, 64
  %v2183 = vpop.permute.xlu0 %2182
  %v2184 = vsel %vm257, %v2183, 0
  %2186 = vmatprep.subr.mxu0 0.0
  %2187 = vmatpush1.msra.mxu0 %v245
  %2188 = vmatprep.subr.mxu0 0.0
  %2189 = vmatpush1.msra.mxu0 %v246
  %2190 = vmatprep.subr.mxu0 0.0
  %2191 = vmatpush1.msra.mxu0 %v247
  %2192 = vmatprep.subr.mxu0 0.0
  %2193 = vmatpush1.msra.mxu0 %v248
  %2194 = vmatprep.subr.mxu0 0.0
  %2195 = vmatpush1.msra.mxu0 0.0
  %2196 = vmatprep.subr.mxu0 0.0
  %2197 = vmatpush1.msra.mxu0 0.0
  %2198 = vmatprep.subr.mxu0 0.0
  %2199 = vmatpush1.msra.mxu0 0.0
  %2200 = vmatprep.subr.mxu0 0.0
  %2201 = vmatpush1.msra.mxu0 0.0
  %2202 = vmatprep.subr.mxu0 0.0
  %2203 = vmatpush1.msra.mxu0 0.0
  %2204 = vmatprep.subr.mxu0 0.0
  %2205 = vmatpush1.msra.mxu0 0.0
  %2206 = vmatprep.subr.mxu0 0.0
  %2207 = vmatpush1.msra.mxu0 0.0
  %2208 = vmatprep.subr.mxu0 0.0
  %2209 = vmatpush1.msra.mxu0 0.0
  %2210 = vmatprep.subr.mxu0 0.0
  %2211 = vmatpush1.msra.mxu0 0.0
  %2212 = vmatprep.subr.mxu0 0.0
  %2213 = vmatpush1.msra.mxu0 0.0
  %2214 = vmatprep.subr.mxu0 0.0
  %2215 = vmatpush1.msra.mxu0 0.0
  %2216 = vmatprep.subr.mxu0 0.0
  %2217 = vmatpush1.msra.mxu0 0.0
  %2218 = vmatprep.subr.mxu0 0.0
  %2219 = vmatpush1.msra.mxu0 0.0
  %2220 = vmatprep.subr.mxu0 0.0
  %2221 = vmatpush1.msra.mxu0 0.0
  %2222 = vmatprep.subr.mxu0 0.0
  %2223 = vmatpush1.msra.mxu0 0.0
  %2224 = vmatprep.subr.mxu0 0.0
  %2225 = vmatpush1.msra.mxu0 0.0
  %2226 = vmatprep.subr.mxu0 0.0
  %2227 = vmatpush1.msra.mxu0 0.0
  %2228 = vmatprep.subr.mxu0 0.0
  %2229 = vmatpush1.msra.mxu0 0.0
  %2230 = vmatprep.subr.mxu0 0.0
  %2231 = vmatpush1.msra.mxu0 0.0
  %2232 = vmatprep.subr.mxu0 0.0
  %2233 = vmatpush1.msra.mxu0 0.0
  %2234 = vmatprep.subr.mxu0 0.0
  %2235 = vmatpush1.msra.mxu0 0.0
  %2236 = vmatprep.subr.mxu0 0.0
  %2237 = vmatpush1.msra.mxu0 0.0
  %2238 = vmatprep.subr.mxu0 0.0
  %2239 = vmatpush1.msra.mxu0 0.0
  %2240 = vmatprep.subr.mxu0 0.0
  %2241 = vmatpush1.msra.mxu0 0.0
  %2242 = vmatprep.subr.mxu0 0.0
  %2243 = vmatpush1.msra.mxu0 0.0
  %2244 = vmatprep.subr.mxu0 0.0
  %2245 = vmatpush1.msra.mxu0 0.0
  %2246 = vmatprep.subr.mxu0 0.0
  %2247 = vmatpush1.msra.mxu0 0.0
  %2248 = vmatprep.subr.mxu0 0.0
  %2249 = vmatpush1.msra.mxu0 0.0
  %2250 = vmatprep.mubr.f32.mxu0 0.0
  %2251 = vmatmul.mubr.f32.gmra.mrb[0].mxu0 %v2184
  %v2252 = vpop.f32.mrb[0].mxu0
  %v2253 = vadd.f32 0.0, %v2252
  %v2254 = vpop.f32.mrb[0].mxu0
  %2255 = vdwg.mxu0
  %v2256 = vadd.f32 %v2178, %v2253
  %v2257 = vxor.u32 %v2256, 2147483648
  %v2258 = vmul.f32 %v2257, 1.442695
  %v2259 = vpow.pop %v2258
  %v2260 = vadd.f32 %v2259, 1.0
  %v2261 = vrcp.pop %v2260
  %v2262 = vmul.f32 1.0, %v2261
  %v2263 = vtanh.pop %v2256
  %v2264 = vmul.f32 %v2262, %v2004
  %2266 = vrot.lane.b32.xlu0 %v2263, 32
  %v2267 = vpop.permute.xlu0 %2266
  %v2269 = vmul.f32 %v2262, %v2267
  %2271 = vrot.lane.b32.xlu0 %v2269, 32
  %v2272 = vpop.permute.xlu0 %2271
  %v2274 = vadd.f32 %v2264, %v2272
  %v2275 = vtanh.pop %v2274
  %2277 = vrot.lane.b32.xlu0 %v2275, 32
  %v2278 = vpop.permute.xlu0 %2277
  %v2280 = vmul.f32 %v2262, %v2278
  %2281 = vmatprep.subr.mxu0 0.0
  %2282 = vmatpush1.msra.mxu0 %v241
  %2283 = vmatprep.subr.mxu0 0.0
  %2284 = vmatpush1.msra.mxu0 %v242
  %2285 = vmatprep.subr.mxu0 0.0
  %2286 = vmatpush1.msra.mxu0 %v243
  %2287 = vmatprep.subr.mxu0 0.0
  %2288 = vmatpush1.msra.mxu0 %v244
  %2289 = vmatprep.subr.mxu0 0.0
  %2290 = vmatpush1.msra.mxu0 0.0
  %2291 = vmatprep.subr.mxu0 0.0
  %2292 = vmatpush1.msra.mxu0 0.0
  %2293 = vmatprep.subr.mxu0 0.0
  %2294 = vmatpush1.msra.mxu0 0.0
  %2295 = vmatprep.subr.mxu0 0.0
  %2296 = vmatpush1.msra.mxu0 0.0
  %2297 = vmatprep.subr.mxu0 0.0
  %2298 = vmatpush1.msra.mxu0 0.0
  %2299 = vmatprep.subr.mxu0 0.0
  %2300 = vmatpush1.msra.mxu0 0.0
  %2301 = vmatprep.subr.mxu0 0.0
  %2302 = vmatpush1.msra.mxu0 0.0
  %2303 = vmatprep.subr.mxu0 0.0
  %2304 = vmatpush1.msra.mxu0 0.0
  %2305 = vmatprep.subr.mxu0 0.0
  %2306 = vmatpush1.msra.mxu0 0.0
  %2307 = vmatprep.subr.mxu0 0.0
  %2308 = vmatpush1.msra.mxu0 0.0
  %2309 = vmatprep.subr.mxu0 0.0
  %2310 = vmatpush1.msra.mxu0 0.0
  %2311 = vmatprep.subr.mxu0 0.0
  %2312 = vmatpush1.msra.mxu0 0.0
  %2313 = vmatprep.subr.mxu0 0.0
  %2314 = vmatpush1.msra.mxu0 0.0
  %2315 = vmatprep.subr.mxu0 0.0
  %2316 = vmatpush1.msra.mxu0 0.0
  %2317 = vmatprep.subr.mxu0 0.0
  %2318 = vmatpush1.msra.mxu0 0.0
  %2319 = vmatprep.subr.mxu0 0.0
  %2320 = vmatpush1.msra.mxu0 0.0
  %2321 = vmatprep.subr.mxu0 0.0
  %2322 = vmatpush1.msra.mxu0 0.0
  %2323 = vmatprep.subr.mxu0 0.0
  %2324 = vmatpush1.msra.mxu0 0.0
  %2325 = vmatprep.subr.mxu0 0.0
  %2326 = vmatpush1.msra.mxu0 0.0
  %2327 = vmatprep.subr.mxu0 0.0
  %2328 = vmatpush1.msra.mxu0 0.0
  %2329 = vmatprep.subr.mxu0 0.0
  %2330 = vmatpush1.msra.mxu0 0.0
  %2331 = vmatprep.subr.mxu0 0.0
  %2332 = vmatpush1.msra.mxu0 0.0
  %2333 = vmatprep.subr.mxu0 0.0
  %2334 = vmatpush1.msra.mxu0 0.0
  %2335 = vmatprep.subr.mxu0 0.0
  %2336 = vmatpush1.msra.mxu0 0.0
  %2337 = vmatprep.subr.mxu0 0.0
  %2338 = vmatpush1.msra.mxu0 0.0
  %2339 = vmatprep.subr.mxu0 0.0
  %2340 = vmatpush1.msra.mxu0 0.0
  %2341 = vmatprep.subr.mxu0 0.0
  %2342 = vmatpush1.msra.mxu0 0.0
  %2343 = vmatprep.subr.mxu0 0.0
  %2344 = vmatpush1.msra.mxu0 0.0
  %2345 = vmatprep.mubr.f32.mxu0 0.0
  %2346 = vmatmul.mubr.f32.gmra.mrb[0].mxu0 %v2109
  %v2347 = vpop.f32.mrb[0].mxu0
  %v2348 = vadd.f32 0.0, %v2347
  %v2349 = vpop.f32.mrb[0].mxu0
  %2350 = vdwg.mxu0
  %v2351 = vadd.f32 %v384, %v2348
  %v2352 = vxor.u32 %v2351, 2147483648
  %v2353 = vmul.f32 %v2352, 1.442695
  %v2354 = vpow.pop %v2353
  %v2355 = vadd.f32 %v2354, 1.0
  %v2356 = vrcp.pop %v2355
  %v2357 = vmul.f32 1.0, %v2356
  %v2358 = vtanh.pop %v2351
  %v2359 = vmul.f32 %v2357, %v2099
  %2361 = vrot.lane.b32.xlu0 %v2358, 32
  %v2362 = vpop.permute.xlu0 %2361
  %v2364 = vmul.f32 %v2357, %v2362
  %2366 = vrot.lane.b32.xlu0 %v2364, 32
  %v2367 = vpop.permute.xlu0 %2366
  %v2369 = vadd.f32 %v2359, %v2367
  %v2370 = vtanh.pop %v2369
  %2372 = vrot.lane.b32.xlu0 %v2370, 32
  %v2373 = vpop.permute.xlu0 %2372
  %v2375 = vmul.f32 %v2357, %v2373
  %2377 = vrot.lane.b32.xlu0 %v2375, 64
  %v2378 = vpop.permute.xlu0 %2377
  %v2379 = vsel %vm257, %v2378, 0
  %2381 = vmatprep.subr.mxu0 0.0
  %2382 = vmatpush1.msra.mxu0 %v237
  %2383 = vmatprep.subr.mxu0 0.0
  %2384 = vmatpush1.msra.mxu0 %v238
  %2385 = vmatprep.subr.mxu0 0.0
  %2386 = vmatpush1.msra.mxu0 %v239
  %2387 = vmatprep.subr.mxu0 0.0
  %2388 = vmatpush1.msra.mxu0 %v240
  %2389 = vmatprep.subr.mxu0 0.0
  %2390 = vmatpush1.msra.mxu0 0.0
  %2391 = vmatprep.subr.mxu0 0.0
  %2392 = vmatpush1.msra.mxu0 0.0
  %2393 = vmatprep.subr.mxu0 0.0
  %2394 = vmatpush1.msra.mxu0 0.0
  %2395 = vmatprep.subr.mxu0 0.0
  %2396 = vmatpush1.msra.mxu0 0.0
  %2397 = vmatprep.subr.mxu0 0.0
  %2398 = vmatpush1.msra.mxu0 0.0
  %2399 = vmatprep.subr.mxu0 0.0
  %2400 = vmatpush1.msra.mxu0 0.0
  %2401 = vmatprep.subr.mxu0 0.0
  %2402 = vmatpush1.msra.mxu0 0.0
  %2403 = vmatprep.subr.mxu0 0.0
  %2404 = vmatpush1.msra.mxu0 0.0
  %2405 = vmatprep.subr.mxu0 0.0
  %2406 = vmatpush1.msra.mxu0 0.0
  %2407 = vmatprep.subr.mxu0 0.0
  %2408 = vmatpush1.msra.mxu0 0.0
  %2409 = vmatprep.subr.mxu0 0.0
  %2410 = vmatpush1.msra.mxu0 0.0
  %2411 = vmatprep.subr.mxu0 0.0
  %2412 = vmatpush1.msra.mxu0 0.0
  %2413 = vmatprep.subr.mxu0 0.0
  %2414 = vmatpush1.msra.mxu0 0.0
  %2415 = vmatprep.subr.mxu0 0.0
  %2416 = vmatpush1.msra.mxu0 0.0
  %2417 = vmatprep.subr.mxu0 0.0
  %2418 = vmatpush1.msra.mxu0 0.0
  %2419 = vmatprep.subr.mxu0 0.0
  %2420 = vmatpush1.msra.mxu0 0.0
  %2421 = vmatprep.subr.mxu0 0.0
  %2422 = vmatpush1.msra.mxu0 0.0
  %2423 = vmatprep.subr.mxu0 0.0
  %2424 = vmatpush1.msra.mxu0 0.0
  %2425 = vmatprep.subr.mxu0 0.0
  %2426 = vmatpush1.msra.mxu0 0.0
  %2427 = vmatprep.subr.mxu0 0.0
  %2428 = vmatpush1.msra.mxu0 0.0
  %2429 = vmatprep.subr.mxu0 0.0
  %2430 = vmatpush1.msra.mxu0 0.0
  %2431 = vmatprep.subr.mxu0 0.0
  %2432 = vmatpush1.msra.mxu0 0.0
  %2433 = vmatprep.subr.mxu0 0.0
  %2434 = vmatpush1.msra.mxu0 0.0
  %2435 = vmatprep.subr.mxu0 0.0
  %2436 = vmatpush1.msra.mxu0 0.0
  %2437 = vmatprep.subr.mxu0 0.0
  %2438 = vmatpush1.msra.mxu0 0.0
  %2439 = vmatprep.subr.mxu0 0.0
  %2440 = vmatpush1.msra.mxu0 0.0
  %2441 = vmatprep.subr.mxu0 0.0
  %2442 = vmatpush1.msra.mxu0 0.0
  %2443 = vmatprep.subr.mxu0 0.0
  %2444 = vmatpush1.msra.mxu0 0.0
  %2445 = vmatprep.mubr.f32.mxu0 0.0
  %2446 = vmatmul.mubr.f32.gmra.mrb[0].mxu0 %v2379
  %v2447 = vpop.f32.mrb[0].mxu0
  %v2448 = vadd.f32 %v489, %v2447
  %v2449 = vpop.f32.mrb[0].mxu0
  %2450 = vdwg.mxu0
  %2452 = vrot.lane.b32.xlu0 %v2280, 64
  %v2453 = vpop.permute.xlu0 %2452
  %v2454 = vsel %vm257, %v2453, 0
  %2456 = vmatprep.subr.mxu0 0.0
  %2457 = vmatpush1.msra.mxu0 %v245
  %2458 = vmatprep.subr.mxu0 0.0
  %2459 = vmatpush1.msra.mxu0 %v246
  %2460 = vmatprep.subr.mxu0 0.0
  %2461 = vmatpush1.msra.mxu0 %v247
  %2462 = vmatprep.subr.mxu0 0.0
  %2463 = vmatpush1.msra.mxu0 %v248
  %2464 = vmatprep.subr.mxu0 0.0
  %2465 = vmatpush1.msra.mxu0 0.0
  %2466 = vmatprep.subr.mxu0 0.0
  %2467 = vmatpush1.msra.mxu0 0.0
  %2468 = vmatprep.subr.mxu0 0.0
  %2469 = vmatpush1.msra.mxu0 0.0
  %2470 = vmatprep.subr.mxu0 0.0
  %2471 = vmatpush1.msra.mxu0 0.0
  %2472 = vmatprep.subr.mxu0 0.0
  %2473 = vmatpush1.msra.mxu0 0.0
  %2474 = vmatprep.subr.mxu0 0.0
  %2475 = vmatpush1.msra.mxu0 0.0
  %2476 = vmatprep.subr.mxu0 0.0
  %2477 = vmatpush1.msra.mxu0 0.0
  %2478 = vmatprep.subr.mxu0 0.0
  %2479 = vmatpush1.msra.mxu0 0.0
  %2480 = vmatprep.subr.mxu0 0.0
  %2481 = vmatpush1.msra.mxu0 0.0
  %2482 = vmatprep.subr.mxu0 0.0
  %2483 = vmatpush1.msra.mxu0 0.0
  %2484 = vmatprep.subr.mxu0 0.0
  %2485 = vmatpush1.msra.mxu0 0.0
  %2486 = vmatprep.subr.mxu0 0.0
  %2487 = vmatpush1.msra.mxu0 0.0
  %2488 = vmatprep.subr.mxu0 0.0
  %2489 = vmatpush1.msra.mxu0 0.0
  %2490 = vmatprep.subr.mxu0 0.0
  %2491 = vmatpush1.msra.mxu0 0.0
  %2492 = vmatprep.subr.mxu0 0.0
  %2493 = vmatpush1.msra.mxu0 0.0
  %2494 = vmatprep.subr.mxu0 0.0
  %2495 = vmatpush1.msra.mxu0 0.0
  %2496 = vmatprep.subr.mxu0 0.0
  %2497 = vmatpush1.msra.mxu0 0.0
  %2498 = vmatprep.subr.mxu0 0.0
  %2499 = vmatpush1.msra.mxu0 0.0
  %2500 = vmatprep.subr.mxu0 0.0
  %2501 = vmatpush1.msra.mxu0 0.0
  %2502 = vmatprep.subr.mxu0 0.0
  %2503 = vmatpush1.msra.mxu0 0.0
  %2504 = vmatprep.subr.mxu0 0.0
  %2505 = vmatpush1.msra.mxu0 0.0
  %2506 = vmatprep.subr.mxu0 0.0
  %2507 = vmatpush1.msra.mxu0 0.0
  %2508 = vmatprep.subr.mxu0 0.0
  %2509 = vmatpush1.msra.mxu0 0.0
  %2510 = vmatprep.subr.mxu0 0.0
  %2511 = vmatpush1.msra.mxu0 0.0
  %2512 = vmatprep.subr.mxu0 0.0
  %2513 = vmatpush1.msra.mxu0 0.0
  %2514 = vmatprep.subr.mxu0 0.0
  %2515 = vmatpush1.msra.mxu0 0.0
  %2516 = vmatprep.subr.mxu0 0.0
  %2517 = vmatpush1.msra.mxu0 0.0
  %2518 = vmatprep.subr.mxu0 0.0
  %2519 = vmatpush1.msra.mxu0 0.0
  %2520 = vmatprep.mubr.f32.mxu0 0.0
  %2521 = vmatmul.mubr.f32.gmra.mrb[0].mxu0 %v2454
  %v2522 = vpop.f32.mrb[0].mxu0
  %v2523 = vadd.f32 0.0, %v2522
  %v2524 = vpop.f32.mrb[0].mxu0
  %2525 = vdwg.mxu0
  %v2526 = vadd.f32 %v2448, %v2523
  %v2527 = vxor.u32 %v2526, 2147483648
  %v2528 = vmul.f32 %v2527, 1.442695
  %v2529 = vpow.pop %v2528
  %v2530 = vadd.f32 %v2529, 1.0
  %v2531 = vrcp.pop %v2530
  %v2532 = vmul.f32 1.0, %v2531
  %v2533 = vtanh.pop %v2526
  %v2534 = vmul.f32 %v2532, %v2274
  %2536 = vrot.lane.b32.xlu0 %v2533, 32
  %v2537 = vpop.permute.xlu0 %2536
  %v2539 = vmul.f32 %v2532, %v2537
  %2541 = vrot.lane.b32.xlu0 %v2539, 32
  %v2542 = vpop.permute.xlu0 %2541
  %v2544 = vadd.f32 %v2534, %v2542
  %v2545 = vtanh.pop %v2544
  %2547 = vrot.lane.b32.xlu0 %v2545, 32
  %v2548 = vpop.permute.xlu0 %2547
  %v2550 = vmul.f32 %v2532, %v2548
  %v2551 = vld [vmem:[%s8] sm:$0x1]
  %v2553 = vlaneseq
  %v2554 = vshrl.u32 %v2553, 7
  %v2555 = vsub.s32 0, %v2554
  %v2556 = vrot.slane %v2551, %v2555
  %2557 = vrot.lane.b32.xlu0 %v2556, 64
  %v2558 = vpop.permute.xlu0 %2557
  %v2560 = vmul.f32 %v2550, %v2558
  %2562 = vrot.lane.b32.xlu0 %v2560, 64
  %v2563 = vpop.permute.xlu0 %2562
  %v2565 = vsel %vm257, %v2563, 0.0
  %2566 = vadd.xlane.f32.xlu0 %v2565
  %v2567 = vpop.xlane.xlu0 %2566
  %v2568 = vld [vmem:[#allocation2] sm:$0x1]
  %v2570 = vlaneseq
  %v2571 = vshrl.u32 %v2570, 7
  %v2572 = vsub.s32 0, %v2571
  %v2573 = vrot.slane %v2568, %v2572
  %v2575 = vadd.f32 %v2567, %v2573
  %v2576 = vxor.u32 %v2575, 2147483648
  %v2577 = vmul.f32 %v2576, 1.442695
  %v2578 = vpow.pop %v2577
  %v2579 = vadd.f32 %v2578, 1.0
  %v2580 = vrcp.pop %v2579
  %v2581 = vmul.f32 1.0, %v2580
  %vm2582 = vcmask 7168
  %2583 = vst.msk [vmem:[%s10] sm:$0xff] %vm2582, %v2581
  // Predicated region
  $region42: #{tpu_custom_call.1} parent=0 // pred_check
    _
  $region43: #{tpu_custom_call.1} parent=0 // pred_check_branch
    %2585 = sbr.rel (0) target = $region45
  $region44: #{tpu_custom_call.1} parent=0 // pred_region
    _
  $region45: #{tpu_custom_call.1} parent=0 // pred_fallthru
    _
  // Predicated region
  $region46: #{tpu_custom_call.1} parent=0 // pred_check
    _
  $region47: #{tpu_custom_call.1} parent=0 // pred_check_branch
    %2587 = sbr.rel (0) target = $region49
  $region48: #{tpu_custom_call.1} parent=0 // pred_region
    _
  $region49: #{tpu_custom_call.1} parent=0 // pred_fallthru
    _

</llo_original>
